<compile_context>
chip_gen: v5e
topology: v5e:2x2
jax: 0.10.0
libtpu: 0.0.40
codegen_flags: <defaults>
</compile_context>

<pallas_src>
from functools import partial

import numpy as np
import jax
import jax.numpy as jnp
from jax import lax
from jax.experimental import pallas as pl
from jax.experimental.pallas import tpu as pltpu


def _round_up(x, m):
    return ((x + m - 1) // m) * m


def _vmem_capacity_bytes():
    """Physical VMEM per TensorCore; fall back to v7x's 64 MiB (the smallest)."""
    try:
        info = pltpu.get_tpu_info()
        return int(getattr(info, "vmem_capacity_bytes", 64 << 20))
    except Exception:
        return 64 << 20


def _default_ring():
    """DMA ring depth: deeper on v7x (larger HBM latency-bandwidth product)."""
    # TODO(synk): the ideal depth is an empirical per-generation sweep (16/32/64).
    try:
        kind = jax.devices()[0].device_kind.lower()
        if "v7" in kind:
            return 64
    except Exception:
        pass
    return 32


def _gather_kernel(block_tokens, ring, unroll, ids_ref, table_ref, out_ref, sems):
    """Gather `block_tokens` embedding rows straight into the output block.

    ids_ref  : (N_pad,) int32 in SMEM (scalar prefetch)
    table_ref: (V, D_pad) rows -- resident VMEM block (small vocab) or raw HBM ref
    out_ref  : (block_tokens, D_pad) VMEM output block (DMA destination; no
               intermediate row_buf -> no extra vld/vst traffic)
    sems     : (ring,) DMA semaphores -- ring of in-flight row copies
    """
    base = pl.program_id(0) * block_tokens

    def issue(t, carry):
        # Read the token id *before* any semaphore wait: .wait() breaks SMEM
        # sst->sld forwarding and would stall the scalar path feeding the very
        # next DMA descriptor.
        idx = ids_ref[base + t]
        slot = t % ring

        @pl.when(t >= ring)
        def _():
            # Retire the copy issued `ring` iterations ago on this slot.  The
            # placeholder src (row 0) is safe only because every row copy has
            # identical shape/dtype (same byte count on the semaphore).
            pltpu.make_async_copy(
                table_ref.at[pl.ds(0, 1), :],
                out_ref.at[pl.ds(t - ring, 1), :],
                sems.at[slot]).wait()

        pltpu.make_async_copy(
            table_ref.at[pl.ds(idx, 1), :],
            out_ref.at[pl.ds(t, 1), :],
            sems.at[slot]).start()
        return carry

    lax.fori_loop(0, block_tokens, issue, 0,
                  unroll=max(1, min(unroll, block_tokens)))

    # Drain the last `ring` outstanding copies.
    n_drain = min(ring, block_tokens)

    def drain(r, carry):
        t = block_tokens - n_drain + r
        pltpu.make_async_copy(
            table_ref.at[pl.ds(0, 1), :],
            out_ref.at[pl.ds(t, 1), :],
            sems.at[t % ring]).wait()
        return carry

    lax.fori_loop(0, n_drain, drain, 0, unroll=max(1, min(unroll, n_drain)))


def embedding_lookup(token_ids, emb_table, *, block_tokens=256, ring=None,
                     unroll=8, table_in_vmem=None):
    """emb_table[token_ids] via a batched-DMA Pallas gather (bit-exact).

    token_ids: (N,) integer array
    emb_table: (V, D) float array
    returns  : (N, D), same dtype as emb_table
    """
    token_ids = token_ids.reshape(-1).astype(jnp.int32)
    n = int(token_ids.shape[0])
    v, d = int(emb_table.shape[0]), int(emb_table.shape[1])

    # Lane-dense rows: pad D to a multiple of 128.  Hot-path callers
    # (NonContextualEmbeddingsJax) pre-pad the table once at construction, so
    # this per-call pad only triggers for ad-hoc unaligned tables.
    d_pad = _round_up(d, 128)
    if d_pad != d:
        emb_table = jnp.pad(emb_table, ((0, 0), (0, d_pad - d)))

    # Tokens per grid step: multiple of 8 (sublane-dense output block), clamped
    # so there are >= 2 grid blocks whenever N allows (v7x: 2 TensorCores).
    t = min(block_tokens, max(8, _round_up((n + 1) // 2, 8)))
    n_pad = _round_up(n, t)
    if n_pad != n:
        token_ids = jnp.pad(token_ids, (0, n_pad - n))   # padded ids -> row 0, sliced off
    num_blocks = n_pad // t

    if ring is None:
        ring = _default_ring()
    ring = max(1, min(ring, t))

    itemsize = jnp.dtype(emb_table.dtype).itemsize
    block_bytes = t * d_pad * itemsize
    table_bytes = v * d_pad * itemsize

    cap = _vmem_capacity_bytes()
    budget = int((cap * 6) // 10)   # ~38 MiB on v7x (64 MiB), ~76 MiB on v5e/v6e (128 MiB)

    if table_in_vmem is None:
        # Resident-table fast path: the table is DMA'd into VMEM once (constant
        # block index) and the gather becomes VMEM-local row copies.  Budget 2x
        # the table since the pipeline may double-buffer the block.
        table_in_vmem = (2 * table_bytes + 2 * block_bytes + (1 << 20)) <= budget

    if table_in_vmem:
        table_spec = pl.BlockSpec((v, d_pad), lambda i, ids: (0, 0))   # resident in VMEM
    else:
        table_spec = pl.BlockSpec(memory_space=pl.ANY)                 # stays in HBM

    out = pl.pallas_call(
        partial(_gather_kernel, t, ring, unroll),
        out_shape=jax.ShapeDtypeStruct((n_pad, d_pad), emb_table.dtype),
        grid_spec=pltpu.PrefetchScalarGridSpec(
            num_scalar_prefetch=1,          # token ids -> SMEM before the grid runs
            grid=(num_blocks,),
            in_specs=[table_spec],
            out_specs=pl.BlockSpec((t, d_pad), lambda i, ids: (i, 0)),
            scratch_shapes=[pltpu.SemaphoreType.DMA((ring,))],
        ),
        compiler_params=pltpu.CompilerParams(
            dimension_semantics=("parallel",),   # token blocks are independent
            vmem_limit_bytes=budget),
    )(token_ids, emb_table)

    return out[:n, :d]


class NonContextualEmbeddingsJax:
    """JAX/Pallas port of NonContextualEmbeddings (forward pass only)."""

    def __init__(self, word2id, embeddings, unk_token, pad_token, static=True):
        self._word2id = dict(word2id)
        self._unk_token = unk_token
        self._pad_token = pad_token
        emb = jnp.asarray(embeddings)
        self.emb_dim = int(emb.shape[1])
        # Pre-pad the (constant) table to a lane-dense width once, instead of
        # materializing a padded HBM copy on every forward call.
        d_pad = _round_up(self.emb_dim, 128)
        if d_pad != self.emb_dim:
            emb = jnp.pad(emb, ((0, 0), (0, d_pad - self.emb_dim)))
        self._embeddings = emb

    def _encode(self, sentences):
        # TODO(synk): string->id dict lookup and Python-level sorting have no
        # Pallas equivalent; this stays on host, mirroring the reference.
        sentences = sorted(sentences, key=len, reverse=True)
        max_len = len(sentences[0])
        b = len(sentences)
        pad_id = self._word2id[self._pad_token]
        unk_id = self._word2id[self._unk_token]
        ids = np.full((b, max_len), pad_id, dtype=np.int32)
        att = np.zeros((b, max_len), dtype=bool)
        for sidx, sentence in enumerate(sentences):
            for tidx, token in enumerate(sentence):
                ids[sidx, tidx] = self._word2id.get(token, unk_id)
                att[sidx, tidx] = True
        return ids, att

    def forward(self, sentences):
        ids, att = self._encode(sentences)
        b, max_len = ids.shape
        emb_flat = embedding_lookup(jnp.asarray(ids.reshape(-1)), self._embeddings)
        emb_words = emb_flat[:, :self.emb_dim].reshape(b, max_len, self.emb_dim)
        att_words = jnp.asarray(att)                     # (B, L) bool
        return emb_words, att_words

    def embed(self, sentences):
        emb_words, _ = self.forward(sentences)
        return [np.asarray(emb_words[sidx, :len(sentence)])
                for sidx, sentence in enumerate(sentences)]


if __name__ == "__main__":
    # ---- module-level test (small shapes) -------------------------------
    VOCAB = 64
    EMB_DIM = 128
    key = jax.random.PRNGKey(0)
    k0, k1, k2, k3 = jax.random.split(key, 4)
    emb_table = jax.random.normal(k0, (VOCAB, EMB_DIM), dtype=jnp.float32)

    words = [f"w{i}" for i in range(VOCAB - 2)] + ["UNK", "PAD"]
    word2id = {w: i for i, w in enumerate(words)}

    module = NonContextualEmbeddingsJax(word2id, emb_table, "UNK", "PAD")

    sentences = [
        ["w0", "w5", "w7"],
        ["w10", "w11", "w12", "w13", "oov_token"],   # contains an OOV -> UNK
        ["w3", "w61"],
    ]

    emb_words, att_words = module.forward(sentences)
    emb_words = jax.block_until_ready(emb_words)
    att_words = jax.block_until_ready(att_words)

    ids, _ = module._encode(sentences)
    ref = jnp.take(emb_table, jnp.asarray(ids), axis=0)
    np.testing.assert_array_equal(np.asarray(emb_words), np.asarray(ref))

    expected_mask = np.array(
        [[True] * 5,
         [True, True, True, False, False],
         [True, True, False, False, False]])
    assert np.array_equal(np.asarray(att_words), expected_mask)
    assert emb_words.shape == (3, 5, EMB_DIM) and emb_words.dtype == jnp.float32
    assert att_words.shape == (3, 5) and att_words.dtype == jnp.bool_

    # ---- direct kernel test: multi-block grid, resident-table path ------
    V2, D2, N2 = 512, 256, 1000
    table2 = jax.random.normal(k1, (V2, D2), dtype=jnp.float32)
    ids2 = jax.random.randint(k2, (N2,), 0, V2, dtype=jnp.int32)
    got2 = jax.block_until_ready(
        embedding_lookup(ids2, table2, block_tokens=128, ring=16))
    np.testing.assert_array_equal(np.asarray(got2),
                                  np.asarray(jnp.take(table2, ids2, axis=0)))

    # ---- direct kernel test: forced HBM row-DMA path ---------------------
    V4, D4, N4 = 256, 128, 300
    table4 = jax.random.normal(k1, (V4, D4), dtype=jnp.float32)
    ids4 = jax.random.randint(k3, (N4,), 0, V4, dtype=jnp.int32)
    got4 = jax.block_until_ready(
        embedding_lookup(ids4, table4, block_tokens=128, ring=16,
                         table_in_vmem=False))
    np.testing.assert_array_equal(np.asarray(got4),
                                  np.asarray(jnp.take(table4, ids4, axis=0)))

    # ---- direct kernel test: non-128-aligned embedding dim --------------
    V3, D3, N3 = 64, 96, 37
    table3 = jax.random.normal(k3, (V3, D3), dtype=jnp.float32)
    ids3 = jax.random.randint(k2, (N3,), 0, V3, dtype=jnp.int32)
    got3 = jax.block_until_ready(embedding_lookup(ids3, table3))
    np.testing.assert_array_equal(np.asarray(got3),
                                  np.asarray(jnp.take(table3, ids3, axis=0)))

    print("KERNEL_OK")
</pallas_src>

<mosaic_0001>
module attributes {stable_mosaic.version = 11 : i64} {
  func.func @_gather_kernel(%arg0: i32, %arg1: memref<16xi32, #tpu.memory_space<smem>>, %arg2: memref<64x128xf32, #tpu.memory_space<vmem>>, %arg3: memref<8x128xf32, #tpu.memory_space<vmem>>, %arg4: memref<8x!tpu.dma_semaphore, #tpu.memory_space<semaphore_mem>>) attributes {dimension_semantics = [#tpu.dimension_semantics<parallel>], iteration_bounds = array<i64: 2>, scalar_prefetch = 1 : i64, scratch_operands = 1 : i64, tpu.core_type = #tpu.core_type<tc>, window_params = [{pipeline_mode = #tpu.pipeline_mode<synchronous>, transform_indices = @transform_0, window_bounds = array<i64: 64, 128>}, {transform_indices = @transform_1, window_bounds = array<i64: 8, 128>}]} {
    %c8_i32 = arith.constant 8 : i32
    %0 = arith.muli %arg0, %c8_i32 : i32
    %c0_i32 = arith.constant 0 : i32
    %1 = arith.addi %0, %c0_i32 : i32
    %2 = arith.index_cast %1 : i32 to index
    %3 = memref.load %arg1[%2] : memref<16xi32, #tpu.memory_space<smem>>
    %c8_i32_0 = arith.constant 8 : i32
    %c0_i32_1 = arith.constant 0 : i32
    %4 = arith.cmpi eq, %c8_i32_0, %c0_i32_1 : i32
    %c1_i32 = arith.constant 1 : i32
    %5 = arith.select %4, %c1_i32, %c8_i32_0 : i32
    %6 = arith.remsi %c0_i32, %5 : i32
    %c0_i32_2 = arith.constant 0 : i32
    %7 = arith.cmpi ne, %6, %c0_i32_2 : i32
    %c0_i32_3 = arith.constant 0 : i32
    %8 = arith.cmpi slt, %6, %c0_i32_3 : i32
    %c0_i32_4 = arith.constant 0 : i32
    %9 = arith.cmpi slt, %5, %c0_i32_4 : i32
    %10 = arith.xori %8, %9 : i1
    %11 = arith.andi %10, %7 : i1
    %12 = arith.addi %6, %5 : i32
    %13 = arith.select %11, %12, %6 : i32
    %c8_i32_5 = arith.constant 8 : i32
    %14 = arith.cmpi sge, %c0_i32, %c8_i32_5 : i32
    %15 = arith.extui %14 : i1 to i32
    %c0_i32_6 = arith.constant 0 : i32
    %16 = arith.cmpi ne, %15, %c0_i32_6 : i32
    scf.if %16 {
      %c8_i32_170 = arith.constant 8 : i32
      %281 = arith.subi %c0_i32, %c8_i32_170 : i32
      %c0_i32_171 = arith.constant 0 : i32
      %c0_i32_172 = arith.constant 0 : i32
      %282 = tpu.memref_slice %arg2[%c0_i32_171, %c0_i32_172] : memref<64x128xf32, #tpu.memory_space<vmem>> -> memref<1x128xf32, #tpu.memory_space<vmem>>
      %c0_i32_173 = arith.constant 0 : i32
      %283 = tpu.memref_slice %arg3[%281, %c0_i32_173] : memref<8x128xf32, #tpu.memory_space<vmem>> -> memref<1x128xf32, #tpu.memory_space<vmem>>
      %284 = tpu.memref_slice %arg4[%13] : memref<8x!tpu.dma_semaphore, #tpu.memory_space<semaphore_mem>> -> memref<1x!tpu.dma_semaphore, #tpu.memory_space<semaphore_mem>>
      %285 = tpu.memref_squeeze %284 : memref<1x!tpu.dma_semaphore, #tpu.memory_space<semaphore_mem>> -> memref<!tpu.dma_semaphore, #tpu.memory_space<semaphore_mem>>
      tpu.wait_dma2 semaphore(%285 : memref<!tpu.dma_semaphore, #tpu.memory_space<semaphore_mem>>) src(%282 : memref<1x128xf32, #tpu.memory_space<vmem>>) dst(%283 : memref<1x128xf32, #tpu.memory_space<vmem>>)
    } else {
    }
    %c0_i32_7 = arith.constant 0 : i32
    %17 = tpu.memref_slice %arg2[%3, %c0_i32_7] : memref<64x128xf32, #tpu.memory_space<vmem>> -> memref<1x128xf32, #tpu.memory_space<vmem>>
    %c0_i32_8 = arith.constant 0 : i32
    %18 = tpu.memref_slice %arg3[%c0_i32, %c0_i32_8] : memref<8x128xf32, #tpu.memory_space<vmem>> -> memref<1x128xf32, #tpu.memory_space<vmem>>
    %19 = tpu.memref_slice %arg4[%13] : memref<8x!tpu.dma_semaphore, #tpu.memory_space<semaphore_mem>> -> memref<1x!tpu.dma_semaphore, #tpu.memory_space<semaphore_mem>>
    %20 = tpu.memref_squeeze %19 : memref<1x!tpu.dma_semaphore, #tpu.memory_space<semaphore_mem>> -> memref<!tpu.dma_semaphore, #tpu.memory_space<semaphore_mem>>
    tpu.enqueue_dma source(%17 : memref<1x128xf32, #tpu.memory_space<vmem>>) target(%18 : memref<1x128xf32, #tpu.memory_space<vmem>>) target_semaphore(%20 : memref<!tpu.dma_semaphore, #tpu.memory_space<semaphore_mem>>)
    %c1_i32_9 = arith.constant 1 : i32
    %21 = arith.addi %0, %c1_i32_9 : i32
    %22 = arith.index_cast %21 : i32 to index
    %23 = memref.load %arg1[%22] : memref<16xi32, #tpu.memory_space<smem>>
    %c8_i32_10 = arith.constant 8 : i32
    %c0_i32_11 = arith.constant 0 : i32
    %24 = arith.cmpi eq, %c8_i32_10, %c0_i32_11 : i32
    %c1_i32_12 = arith.constant 1 : i32
    %25 = arith.select %24, %c1_i32_12, %c8_i32_10 : i32
    %26 = arith.remsi %c1_i32_9, %25 : i32
    %c0_i32_13 = arith.constant 0 : i32
    %27 = arith.cmpi ne, %26, %c0_i32_13 : i32
    %c0_i32_14 = arith.constant 0 : i32
    %28 = arith.cmpi slt, %26, %c0_i32_14 : i32
    %c0_i32_15 = arith.constant 0 : i32
    %29 = arith.cmpi slt, %25, %c0_i32_15 : i32
    %30 = arith.xori %28, %29 : i1
    %31 = arith.andi %30, %27 : i1
    %32 = arith.addi %26, %25 : i32
    %33 = arith.select %31, %32, %26 : i32
    %c8_i32_16 = arith.constant 8 : i32
    %34 = arith.cmpi sge, %c1_i32_9, %c8_i32_16 : i32
    %35 = arith.extui %34 : i1 to i32
    %c0_i32_17 = arith.constant 0 : i32
    %36 = arith.cmpi ne, %35, %c0_i32_17 : i32
    scf.if %36 {
      %c8_i32_170 = arith.constant 8 : i32
      %281 = arith.subi %c1_i32_9, %c8_i32_170 : i32
      %c0_i32_171 = arith.constant 0 : i32
      %c0_i32_172 = arith.constant 0 : i32
      %282 = tpu.memref_slice %arg2[%c0_i32_171, %c0_i32_172] : memref<64x128xf32, #tpu.memory_space<vmem>> -> memref<1x128xf32, #tpu.memory_space<vmem>>
      %c0_i32_173 = arith.constant 0 : i32
      %283 = tpu.memref_slice %arg3[%281, %c0_i32_173] : memref<8x128xf32, #tpu.memory_space<vmem>> -> memref<1x128xf32, #tpu.memory_space<vmem>>
      %284 = tpu.memref_slice %arg4[%33] : memref<8x!tpu.dma_semaphore, #tpu.memory_space<semaphore_mem>> -> memref<1x!tpu.dma_semaphore, #tpu.memory_space<semaphore_mem>>
      %285 = tpu.memref_squeeze %284 : memref<1x!tpu.dma_semaphore, #tpu.memory_space<semaphore_mem>> -> memref<!tpu.dma_semaphore, #tpu.memory_space<semaphore_mem>>
      tpu.wait_dma2 semaphore(%285 : memref<!tpu.dma_semaphore, #tpu.memory_space<semaphore_mem>>) src(%282 : memref<1x128xf32, #tpu.memory_space<vmem>>) dst(%283 : memref<1x128xf32, #tpu.memory_space<vmem>>)
    } else {
    }
    %c0_i32_18 = arith.constant 0 : i32
    %37 = tpu.memref_slice %arg2[%23, %c0_i32_18] : memref<64x128xf32, #tpu.memory_space<vmem>> -> memref<1x128xf32, #tpu.memory_space<vmem>>
    %c0_i32_19 = arith.constant 0 : i32
    %38 = tpu.memref_slice %arg3[%c1_i32_9, %c0_i32_19] : memref<8x128xf32, #tpu.memory_space<vmem>> -> memref<1x128xf32, #tpu.memory_space<vmem>>
    %39 = tpu.memref_slice %arg4[%33] : memref<8x!tpu.dma_semaphore, #tpu.memory_space<semaphore_mem>> -> memref<1x!tpu.dma_semaphore, #tpu.memory_space<semaphore_mem>>
    %40 = tpu.memref_squeeze %39 : memref<1x!tpu.dma_semaphore, #tpu.memory_space<semaphore_mem>> -> memref<!tpu.dma_semaphore, #tpu.memory_space<semaphore_mem>>
    tpu.enqueue_dma source(%37 : memref<1x128xf32, #tpu.memory_space<vmem>>) target(%38 : memref<1x128xf32, #tpu.memory_space<vmem>>) target_semaphore(%40 : memref<!tpu.dma_semaphore, #tpu.memory_space<semaphore_mem>>)
    %c2_i32 = arith.constant 2 : i32
    %41 = arith.addi %0, %c2_i32 : i32
    %42 = arith.index_cast %41 : i32 to index
    %43 = memref.load %arg1[%42] : memref<16xi32, #tpu.memory_space<smem>>
    %c8_i32_20 = arith.constant 8 : i32
    %c0_i32_21 = arith.constant 0 : i32
    %44 = arith.cmpi eq, %c8_i32_20, %c0_i32_21 : i32
    %c1_i32_22 = arith.constant 1 : i32
    %45 = arith.select %44, %c1_i32_22, %c8_i32_20 : i32
    %46 = arith.remsi %c2_i32, %45 : i32
    %c0_i32_23 = arith.constant 0 : i32
    %47 = arith.cmpi ne, %46, %c0_i32_23 : i32
    %c0_i32_24 = arith.constant 0 : i32
    %48 = arith.cmpi slt, %46, %c0_i32_24 : i32
    %c0_i32_25 = arith.constant 0 : i32
    %49 = arith.cmpi slt, %45, %c0_i32_25 : i32
    %50 = arith.xori %48, %49 : i1
    %51 = arith.andi %50, %47 : i1
    %52 = arith.addi %46, %45 : i32
    %53 = arith.select %51, %52, %46 : i32
    %c8_i32_26 = arith.constant 8 : i32
    %54 = arith.cmpi sge, %c2_i32, %c8_i32_26 : i32
    %55 = arith.extui %54 : i1 to i32
    %c0_i32_27 = arith.constant 0 : i32
    %56 = arith.cmpi ne, %55, %c0_i32_27 : i32
    scf.if %56 {
      %c8_i32_170 = arith.constant 8 : i32
      %281 = arith.subi %c2_i32, %c8_i32_170 : i32
      %c0_i32_171 = arith.constant 0 : i32
      %c0_i32_172 = arith.constant 0 : i32
      %282 = tpu.memref_slice %arg2[%c0_i32_171, %c0_i32_172] : memref<64x128xf32, #tpu.memory_space<vmem>> -> memref<1x128xf32, #tpu.memory_space<vmem>>
      %c0_i32_173 = arith.constant 0 : i32
      %283 = tpu.memref_slice %arg3[%281, %c0_i32_173] : memref<8x128xf32, #tpu.memory_space<vmem>> -> memref<1x128xf32, #tpu.memory_space<vmem>>
      %284 = tpu.memref_slice %arg4[%53] : memref<8x!tpu.dma_semaphore, #tpu.memory_space<semaphore_mem>> -> memref<1x!tpu.dma_semaphore, #tpu.memory_space<semaphore_mem>>
      %285 = tpu.memref_squeeze %284 : memref<1x!tpu.dma_semaphore, #tpu.memory_space<semaphore_mem>> -> memref<!tpu.dma_semaphore, #tpu.memory_space<semaphore_mem>>
      tpu.wait_dma2 semaphore(%285 : memref<!tpu.dma_semaphore, #tpu.memory_space<semaphore_mem>>) src(%282 : memref<1x128xf32, #tpu.memory_space<vmem>>) dst(%283 : memref<1x128xf32, #tpu.memory_space<vmem>>)
    } else {
    }
    %c0_i32_28 = arith.constant 0 : i32
    %57 = tpu.memref_slice %arg2[%43, %c0_i32_28] : memref<64x128xf32, #tpu.memory_space<vmem>> -> memref<1x128xf32, #tpu.memory_space<vmem>>
    %c0_i32_29 = arith.constant 0 : i32
    %58 = tpu.memref_slice %arg3[%c2_i32, %c0_i32_29] : memref<8x128xf32, #tpu.memory_space<vmem>> -> memref<1x128xf32, #tpu.memory_space<vmem>>
    %59 = tpu.memref_slice %arg4[%53] : memref<8x!tpu.dma_semaphore, #tpu.memory_space<semaphore_mem>> -> memref<1x!tpu.dma_semaphore, #tpu.memory_space<semaphore_mem>>
    %60 = tpu.memref_squeeze %59 : memref<1x!tpu.dma_semaphore, #tpu.memory_space<semaphore_mem>> -> memref<!tpu.dma_semaphore, #tpu.memory_space<semaphore_mem>>
    tpu.enqueue_dma source(%57 : memref<1x128xf32, #tpu.memory_space<vmem>>) target(%58 : memref<1x128xf32, #tpu.memory_space<vmem>>) target_semaphore(%60 : memref<!tpu.dma_semaphore, #tpu.memory_space<semaphore_mem>>)
    %c3_i32 = arith.constant 3 : i32
    %61 = arith.addi %0, %c3_i32 : i32
    %62 = arith.index_cast %61 : i32 to index
    %63 = memref.load %arg1[%62] : memref<16xi32, #tpu.memory_space<smem>>
    %c8_i32_30 = arith.constant 8 : i32
    %c0_i32_31 = arith.constant 0 : i32
    %64 = arith.cmpi eq, %c8_i32_30, %c0_i32_31 : i32
    %c1_i32_32 = arith.constant 1 : i32
    %65 = arith.select %64, %c1_i32_32, %c8_i32_30 : i32
    %66 = arith.remsi %c3_i32, %65 : i32
    %c0_i32_33 = arith.constant 0 : i32
    %67 = arith.cmpi ne, %66, %c0_i32_33 : i32
    %c0_i32_34 = arith.constant 0 : i32
    %68 = arith.cmpi slt, %66, %c0_i32_34 : i32
    %c0_i32_35 = arith.constant 0 : i32
    %69 = arith.cmpi slt, %65, %c0_i32_35 : i32
    %70 = arith.xori %68, %69 : i1
    %71 = arith.andi %70, %67 : i1
    %72 = arith.addi %66, %65 : i32
    %73 = arith.select %71, %72, %66 : i32
    %c8_i32_36 = arith.constant 8 : i32
    %74 = arith.cmpi sge, %c3_i32, %c8_i32_36 : i32
    %75 = arith.extui %74 : i1 to i32
    %c0_i32_37 = arith.constant 0 : i32
    %76 = arith.cmpi ne, %75, %c0_i32_37 : i32
    scf.if %76 {
      %c8_i32_170 = arith.constant 8 : i32
      %281 = arith.subi %c3_i32, %c8_i32_170 : i32
      %c0_i32_171 = arith.constant 0 : i32
      %c0_i32_172 = arith.constant 0 : i32
      %282 = tpu.memref_slice %arg2[%c0_i32_171, %c0_i32_172] : memref<64x128xf32, #tpu.memory_space<vmem>> -> memref<1x128xf32, #tpu.memory_space<vmem>>
      %c0_i32_173 = arith.constant 0 : i32
      %283 = tpu.memref_slice %arg3[%281, %c0_i32_173] : memref<8x128xf32, #tpu.memory_space<vmem>> -> memref<1x128xf32, #tpu.memory_space<vmem>>
      %284 = tpu.memref_slice %arg4[%73] : memref<8x!tpu.dma_semaphore, #tpu.memory_space<semaphore_mem>> -> memref<1x!tpu.dma_semaphore, #tpu.memory_space<semaphore_mem>>
      %285 = tpu.memref_squeeze %284 : memref<1x!tpu.dma_semaphore, #tpu.memory_space<semaphore_mem>> -> memref<!tpu.dma_semaphore, #tpu.memory_space<semaphore_mem>>
      tpu.wait_dma2 semaphore(%285 : memref<!tpu.dma_semaphore, #tpu.memory_space<semaphore_mem>>) src(%282 : memref<1x128xf32, #tpu.memory_space<vmem>>) dst(%283 : memref<1x128xf32, #tpu.memory_space<vmem>>)
    } else {
    }
    %c0_i32_38 = arith.constant 0 : i32
    %77 = tpu.memref_slice %arg2[%63, %c0_i32_38] : memref<64x128xf32, #tpu.memory_space<vmem>> -> memref<1x128xf32, #tpu.memory_space<vmem>>
    %c0_i32_39 = arith.constant 0 : i32
    %78 = tpu.memref_slice %arg3[%c3_i32, %c0_i32_39] : memref<8x128xf32, #tpu.memory_space<vmem>> -> memref<1x128xf32, #tpu.memory_space<vmem>>
    %79 = tpu.memref_slice %arg4[%73] : memref<8x!tpu.dma_semaphore, #tpu.memory_space<semaphore_mem>> -> memref<1x!tpu.dma_semaphore, #tpu.memory_space<semaphore_mem>>
    %80 = tpu.memref_squeeze %79 : memref<1x!tpu.dma_semaphore, #tpu.memory_space<semaphore_mem>> -> memref<!tpu.dma_semaphore, #tpu.memory_space<semaphore_mem>>
    tpu.enqueue_dma source(%77 : memref<1x128xf32, #tpu.memory_space<vmem>>) target(%78 : memref<1x128xf32, #tpu.memory_space<vmem>>) target_semaphore(%80 : memref<!tpu.dma_semaphore, #tpu.memory_space<semaphore_mem>>)
    %c4_i32 = arith.constant 4 : i32
    %81 = arith.addi %0, %c4_i32 : i32
    %82 = arith.index_cast %81 : i32 to index
    %83 = memref.load %arg1[%82] : memref<16xi32, #tpu.memory_space<smem>>
    %c8_i32_40 = arith.constant 8 : i32
    %c0_i32_41 = arith.constant 0 : i32
    %84 = arith.cmpi eq, %c8_i32_40, %c0_i32_41 : i32
    %c1_i32_42 = arith.constant 1 : i32
    %85 = arith.select %84, %c1_i32_42, %c8_i32_40 : i32
    %86 = arith.remsi %c4_i32, %85 : i32
    %c0_i32_43 = arith.constant 0 : i32
    %87 = arith.cmpi ne, %86, %c0_i32_43 : i32
    %c0_i32_44 = arith.constant 0 : i32
    %88 = arith.cmpi slt, %86, %c0_i32_44 : i32
    %c0_i32_45 = arith.constant 0 : i32
    %89 = arith.cmpi slt, %85, %c0_i32_45 : i32
    %90 = arith.xori %88, %89 : i1
    %91 = arith.andi %90, %87 : i1
    %92 = arith.addi %86, %85 : i32
    %93 = arith.select %91, %92, %86 : i32
    %c8_i32_46 = arith.constant 8 : i32
    %94 = arith.cmpi sge, %c4_i32, %c8_i32_46 : i32
    %95 = arith.extui %94 : i1 to i32
    %c0_i32_47 = arith.constant 0 : i32
    %96 = arith.cmpi ne, %95, %c0_i32_47 : i32
    scf.if %96 {
      %c8_i32_170 = arith.constant 8 : i32
      %281 = arith.subi %c4_i32, %c8_i32_170 : i32
      %c0_i32_171 = arith.constant 0 : i32
      %c0_i32_172 = arith.constant 0 : i32
      %282 = tpu.memref_slice %arg2[%c0_i32_171, %c0_i32_172] : memref<64x128xf32, #tpu.memory_space<vmem>> -> memref<1x128xf32, #tpu.memory_space<vmem>>
      %c0_i32_173 = arith.constant 0 : i32
      %283 = tpu.memref_slice %arg3[%281, %c0_i32_173] : memref<8x128xf32, #tpu.memory_space<vmem>> -> memref<1x128xf32, #tpu.memory_space<vmem>>
      %284 = tpu.memref_slice %arg4[%93] : memref<8x!tpu.dma_semaphore, #tpu.memory_space<semaphore_mem>> -> memref<1x!tpu.dma_semaphore, #tpu.memory_space<semaphore_mem>>
      %285 = tpu.memref_squeeze %284 : memref<1x!tpu.dma_semaphore, #tpu.memory_space<semaphore_mem>> -> memref<!tpu.dma_semaphore, #tpu.memory_space<semaphore_mem>>
      tpu.wait_dma2 semaphore(%285 : memref<!tpu.dma_semaphore, #tpu.memory_space<semaphore_mem>>) src(%282 : memref<1x128xf32, #tpu.memory_space<vmem>>) dst(%283 : memref<1x128xf32, #tpu.memory_space<vmem>>)
    } else {
    }
    %c0_i32_48 = arith.constant 0 : i32
    %97 = tpu.memref_slice %arg2[%83, %c0_i32_48] : memref<64x128xf32, #tpu.memory_space<vmem>> -> memref<1x128xf32, #tpu.memory_space<vmem>>
    %c0_i32_49 = arith.constant 0 : i32
    %98 = tpu.memref_slice %arg3[%c4_i32, %c0_i32_49] : memref<8x128xf32, #tpu.memory_space<vmem>> -> memref<1x128xf32, #tpu.memory_space<vmem>>
    %99 = tpu.memref_slice %arg4[%93] : memref<8x!tpu.dma_semaphore, #tpu.memory_space<semaphore_mem>> -> memref<1x!tpu.dma_semaphore, #tpu.memory_space<semaphore_mem>>
    %100 = tpu.memref_squeeze %99 : memref<1x!tpu.dma_semaphore, #tpu.memory_space<semaphore_mem>> -> memref<!tpu.dma_semaphore, #tpu.memory_space<semaphore_mem>>
    tpu.enqueue_dma source(%97 : memref<1x128xf32, #tpu.memory_space<vmem>>) target(%98 : memref<1x128xf32, #tpu.memory_space<vmem>>) target_semaphore(%100 : memref<!tpu.dma_semaphore, #tpu.memory_space<semaphore_mem>>)
    %c5_i32 = arith.constant 5 : i32
    %101 = arith.addi %0, %c5_i32 : i32
    %102 = arith.index_cast %101 : i32 to index
    %103 = memref.load %arg1[%102] : memref<16xi32, #tpu.memory_space<smem>>
    %c8_i32_50 = arith.constant 8 : i32
    %c0_i32_51 = arith.constant 0 : i32
    %104 = arith.cmpi eq, %c8_i32_50, %c0_i32_51 : i32
    %c1_i32_52 = arith.constant 1 : i32
    %105 = arith.select %104, %c1_i32_52, %c8_i32_50 : i32
    %106 = arith.remsi %c5_i32, %105 : i32
    %c0_i32_53 = arith.constant 0 : i32
    %107 = arith.cmpi ne, %106, %c0_i32_53 : i32
    %c0_i32_54 = arith.constant 0 : i32
    %108 = arith.cmpi slt, %106, %c0_i32_54 : i32
    %c0_i32_55 = arith.constant 0 : i32
    %109 = arith.cmpi slt, %105, %c0_i32_55 : i32
    %110 = arith.xori %108, %109 : i1
    %111 = arith.andi %110, %107 : i1
    %112 = arith.addi %106, %105 : i32
    %113 = arith.select %111, %112, %106 : i32
    %c8_i32_56 = arith.constant 8 : i32
    %114 = arith.cmpi sge, %c5_i32, %c8_i32_56 : i32
    %115 = arith.extui %114 : i1 to i32
    %c0_i32_57 = arith.constant 0 : i32
    %116 = arith.cmpi ne, %115, %c0_i32_57 : i32
    scf.if %116 {
      %c8_i32_170 = arith.constant 8 : i32
      %281 = arith.subi %c5_i32, %c8_i32_170 : i32
      %c0_i32_171 = arith.constant 0 : i32
      %c0_i32_172 = arith.constant 0 : i32
      %282 = tpu.memref_slice %arg2[%c0_i32_171, %c0_i32_172] : memref<64x128xf32, #tpu.memory_space<vmem>> -> memref<1x128xf32, #tpu.memory_space<vmem>>
      %c0_i32_173 = arith.constant 0 : i32
      %283 = tpu.memref_slice %arg3[%281, %c0_i32_173] : memref<8x128xf32, #tpu.memory_space<vmem>> -> memref<1x128xf32, #tpu.memory_space<vmem>>
      %284 = tpu.memref_slice %arg4[%113] : memref<8x!tpu.dma_semaphore, #tpu.memory_space<semaphore_mem>> -> memref<1x!tpu.dma_semaphore, #tpu.memory_space<semaphore_mem>>
      %285 = tpu.memref_squeeze %284 : memref<1x!tpu.dma_semaphore, #tpu.memory_space<semaphore_mem>> -> memref<!tpu.dma_semaphore, #tpu.memory_space<semaphore_mem>>
      tpu.wait_dma2 semaphore(%285 : memref<!tpu.dma_semaphore, #tpu.memory_space<semaphore_mem>>) src(%282 : memref<1x128xf32, #tpu.memory_space<vmem>>) dst(%283 : memref<1x128xf32, #tpu.memory_space<vmem>>)
    } else {
    }
    %c0_i32_58 = arith.constant 0 : i32
    %117 = tpu.memref_slice %arg2[%103, %c0_i32_58] : memref<64x128xf32, #tpu.memory_space<vmem>> -> memref<1x128xf32, #tpu.memory_space<vmem>>
    %c0_i32_59 = arith.constant 0 : i32
    %118 = tpu.memref_slice %arg3[%c5_i32, %c0_i32_59] : memref<8x128xf32, #tpu.memory_space<vmem>> -> memref<1x128xf32, #tpu.memory_space<vmem>>
    %119 = tpu.memref_slice %arg4[%113] : memref<8x!tpu.dma_semaphore, #tpu.memory_space<semaphore_mem>> -> memref<1x!tpu.dma_semaphore, #tpu.memory_space<semaphore_mem>>
    %120 = tpu.memref_squeeze %119 : memref<1x!tpu.dma_semaphore, #tpu.memory_space<semaphore_mem>> -> memref<!tpu.dma_semaphore, #tpu.memory_space<semaphore_mem>>
    tpu.enqueue_dma source(%117 : memref<1x128xf32, #tpu.memory_space<vmem>>) target(%118 : memref<1x128xf32, #tpu.memory_space<vmem>>) target_semaphore(%120 : memref<!tpu.dma_semaphore, #tpu.memory_space<semaphore_mem>>)
    %c6_i32 = arith.constant 6 : i32
    %121 = arith.addi %0, %c6_i32 : i32
    %122 = arith.index_cast %121 : i32 to index
    %123 = memref.load %arg1[%122] : memref<16xi32, #tpu.memory_space<smem>>
    %c8_i32_60 = arith.constant 8 : i32
    %c0_i32_61 = arith.constant 0 : i32
    %124 = arith.cmpi eq, %c8_i32_60, %c0_i32_61 : i32
    %c1_i32_62 = arith.constant 1 : i32
    %125 = arith.select %124, %c1_i32_62, %c8_i32_60 : i32
    %126 = arith.remsi %c6_i32, %125 : i32
    %c0_i32_63 = arith.constant 0 : i32
    %127 = arith.cmpi ne, %126, %c0_i32_63 : i32
    %c0_i32_64 = arith.constant 0 : i32
    %128 = arith.cmpi slt, %126, %c0_i32_64 : i32
    %c0_i32_65 = arith.constant 0 : i32
    %129 = arith.cmpi slt, %125, %c0_i32_65 : i32
    %130 = arith.xori %128, %129 : i1
    %131 = arith.andi %130, %127 : i1
    %132 = arith.addi %126, %125 : i32
    %133 = arith.select %131, %132, %126 : i32
    %c8_i32_66 = arith.constant 8 : i32
    %134 = arith.cmpi sge, %c6_i32, %c8_i32_66 : i32
    %135 = arith.extui %134 : i1 to i32
    %c0_i32_67 = arith.constant 0 : i32
    %136 = arith.cmpi ne, %135, %c0_i32_67 : i32
    scf.if %136 {
      %c8_i32_170 = arith.constant 8 : i32
      %281 = arith.subi %c6_i32, %c8_i32_170 : i32
      %c0_i32_171 = arith.constant 0 : i32
      %c0_i32_172 = arith.constant 0 : i32
      %282 = tpu.memref_slice %arg2[%c0_i32_171, %c0_i32_172] : memref<64x128xf32, #tpu.memory_space<vmem>> -> memref<1x128xf32, #tpu.memory_space<vmem>>
      %c0_i32_173 = arith.constant 0 : i32
      %283 = tpu.memref_slice %arg3[%281, %c0_i32_173] : memref<8x128xf32, #tpu.memory_space<vmem>> -> memref<1x128xf32, #tpu.memory_space<vmem>>
      %284 = tpu.memref_slice %arg4[%133] : memref<8x!tpu.dma_semaphore, #tpu.memory_space<semaphore_mem>> -> memref<1x!tpu.dma_semaphore, #tpu.memory_space<semaphore_mem>>
      %285 = tpu.memref_squeeze %284 : memref<1x!tpu.dma_semaphore, #tpu.memory_space<semaphore_mem>> -> memref<!tpu.dma_semaphore, #tpu.memory_space<semaphore_mem>>
      tpu.wait_dma2 semaphore(%285 : memref<!tpu.dma_semaphore, #tpu.memory_space<semaphore_mem>>) src(%282 : memref<1x128xf32, #tpu.memory_space<vmem>>) dst(%283 : memref<1x128xf32, #tpu.memory_space<vmem>>)
    } else {
    }
    %c0_i32_68 = arith.constant 0 : i32
    %137 = tpu.memref_slice %arg2[%123, %c0_i32_68] : memref<64x128xf32, #tpu.memory_space<vmem>> -> memref<1x128xf32, #tpu.memory_space<vmem>>
    %c0_i32_69 = arith.constant 0 : i32
    %138 = tpu.memref_slice %arg3[%c6_i32, %c0_i32_69] : memref<8x128xf32, #tpu.memory_space<vmem>> -> memref<1x128xf32, #tpu.memory_space<vmem>>
    %139 = tpu.memref_slice %arg4[%133] : memref<8x!tpu.dma_semaphore, #tpu.memory_space<semaphore_mem>> -> memref<1x!tpu.dma_semaphore, #tpu.memory_space<semaphore_mem>>
    %140 = tpu.memref_squeeze %139 : memref<1x!tpu.dma_semaphore, #tpu.memory_space<semaphore_mem>> -> memref<!tpu.dma_semaphore, #tpu.memory_space<semaphore_mem>>
    tpu.enqueue_dma source(%137 : memref<1x128xf32, #tpu.memory_space<vmem>>) target(%138 : memref<1x128xf32, #tpu.memory_space<vmem>>) target_semaphore(%140 : memref<!tpu.dma_semaphore, #tpu.memory_space<semaphore_mem>>)
    %c7_i32 = arith.constant 7 : i32
    %141 = arith.addi %0, %c7_i32 : i32
    %142 = arith.index_cast %141 : i32 to index
    %143 = memref.load %arg1[%142] : memref<16xi32, #tpu.memory_space<smem>>
    %c8_i32_70 = arith.constant 8 : i32
    %c0_i32_71 = arith.constant 0 : i32
    %144 = arith.cmpi eq, %c8_i32_70, %c0_i32_71 : i32
    %c1_i32_72 = arith.constant 1 : i32
    %145 = arith.select %144, %c1_i32_72, %c8_i32_70 : i32
    %146 = arith.remsi %c7_i32, %145 : i32
    %c0_i32_73 = arith.constant 0 : i32
    %147 = arith.cmpi ne, %146, %c0_i32_73 : i32
    %c0_i32_74 = arith.constant 0 : i32
    %148 = arith.cmpi slt, %146, %c0_i32_74 : i32
    %c0_i32_75 = arith.constant 0 : i32
    %149 = arith.cmpi slt, %145, %c0_i32_75 : i32
    %150 = arith.xori %148, %149 : i1
    %151 = arith.andi %150, %147 : i1
    %152 = arith.addi %146, %145 : i32
    %153 = arith.select %151, %152, %146 : i32
    %c8_i32_76 = arith.constant 8 : i32
    %154 = arith.cmpi sge, %c7_i32, %c8_i32_76 : i32
    %155 = arith.extui %154 : i1 to i32
    %c0_i32_77 = arith.constant 0 : i32
    %156 = arith.cmpi ne, %155, %c0_i32_77 : i32
    scf.if %156 {
      %c8_i32_170 = arith.constant 8 : i32
      %281 = arith.subi %c7_i32, %c8_i32_170 : i32
      %c0_i32_171 = arith.constant 0 : i32
      %c0_i32_172 = arith.constant 0 : i32
      %282 = tpu.memref_slice %arg2[%c0_i32_171, %c0_i32_172] : memref<64x128xf32, #tpu.memory_space<vmem>> -> memref<1x128xf32, #tpu.memory_space<vmem>>
      %c0_i32_173 = arith.constant 0 : i32
      %283 = tpu.memref_slice %arg3[%281, %c0_i32_173] : memref<8x128xf32, #tpu.memory_space<vmem>> -> memref<1x128xf32, #tpu.memory_space<vmem>>
      %284 = tpu.memref_slice %arg4[%153] : memref<8x!tpu.dma_semaphore, #tpu.memory_space<semaphore_mem>> -> memref<1x!tpu.dma_semaphore, #tpu.memory_space<semaphore_mem>>
      %285 = tpu.memref_squeeze %284 : memref<1x!tpu.dma_semaphore, #tpu.memory_space<semaphore_mem>> -> memref<!tpu.dma_semaphore, #tpu.memory_space<semaphore_mem>>
      tpu.wait_dma2 semaphore(%285 : memref<!tpu.dma_semaphore, #tpu.memory_space<semaphore_mem>>) src(%282 : memref<1x128xf32, #tpu.memory_space<vmem>>) dst(%283 : memref<1x128xf32, #tpu.memory_space<vmem>>)
    } else {
    }
    %c0_i32_78 = arith.constant 0 : i32
    %157 = tpu.memref_slice %arg2[%143, %c0_i32_78] : memref<64x128xf32, #tpu.memory_space<vmem>> -> memref<1x128xf32, #tpu.memory_space<vmem>>
    %c0_i32_79 = arith.constant 0 : i32
    %158 = tpu.memref_slice %arg3[%c7_i32, %c0_i32_79] : memref<8x128xf32, #tpu.memory_space<vmem>> -> memref<1x128xf32, #tpu.memory_space<vmem>>
    %159 = tpu.memref_slice %arg4[%153] : memref<8x!tpu.dma_semaphore, #tpu.memory_space<semaphore_mem>> -> memref<1x!tpu.dma_semaphore, #tpu.memory_space<semaphore_mem>>
    %160 = tpu.memref_squeeze %159 : memref<1x!tpu.dma_semaphore, #tpu.memory_space<semaphore_mem>> -> memref<!tpu.dma_semaphore, #tpu.memory_space<semaphore_mem>>
    tpu.enqueue_dma source(%157 : memref<1x128xf32, #tpu.memory_space<vmem>>) target(%158 : memref<1x128xf32, #tpu.memory_space<vmem>>) target_semaphore(%160 : memref<!tpu.dma_semaphore, #tpu.memory_space<semaphore_mem>>)
    %c8_i32_80 = arith.constant 8 : i32
    %c0_i32_81 = arith.constant 0 : i32
    %c0_i32_82 = arith.constant 0 : i32
    %161 = arith.addi %c0_i32_82, %c0_i32_81 : i32
    %c8_i32_83 = arith.constant 8 : i32
    %c0_i32_84 = arith.constant 0 : i32
    %162 = arith.cmpi eq, %c8_i32_83, %c0_i32_84 : i32
    %c1_i32_85 = arith.constant 1 : i32
    %163 = arith.select %162, %c1_i32_85, %c8_i32_83 : i32
    %164 = arith.remsi %161, %163 : i32
    %c0_i32_86 = arith.constant 0 : i32
    %165 = arith.cmpi ne, %164, %c0_i32_86 : i32
    %c0_i32_87 = arith.constant 0 : i32
    %166 = arith.cmpi slt, %164, %c0_i32_87 : i32
    %c0_i32_88 = arith.constant 0 : i32
    %167 = arith.cmpi slt, %163, %c0_i32_88 : i32
    %168 = arith.xori %166, %167 : i1
    %169 = arith.andi %168, %165 : i1
    %170 = arith.addi %164, %163 : i32
    %171 = arith.select %169, %170, %164 : i32
    %c0_i32_89 = arith.constant 0 : i32
    %c0_i32_90 = arith.constant 0 : i32
    %172 = tpu.memref_slice %arg2[%c0_i32_89, %c0_i32_90] : memref<64x128xf32, #tpu.memory_space<vmem>> -> memref<1x128xf32, #tpu.memory_space<vmem>>
    %c0_i32_91 = arith.constant 0 : i32
    %173 = tpu.memref_slice %arg3[%161, %c0_i32_91] : memref<8x128xf32, #tpu.memory_space<vmem>> -> memref<1x128xf32, #tpu.memory_space<vmem>>
    %174 = tpu.memref_slice %arg4[%171] : memref<8x!tpu.dma_semaphore, #tpu.memory_space<semaphore_mem>> -> memref<1x!tpu.dma_semaphore, #tpu.memory_space<semaphore_mem>>
    %175 = tpu.memref_squeeze %174 : memref<1x!tpu.dma_semaphore, #tpu.memory_space<semaphore_mem>> -> memref<!tpu.dma_semaphore, #tpu.memory_space<semaphore_mem>>
    tpu.wait_dma2 semaphore(%175 : memref<!tpu.dma_semaphore, #tpu.memory_space<semaphore_mem>>) src(%172 : memref<1x128xf32, #tpu.memory_space<vmem>>) dst(%173 : memref<1x128xf32, #tpu.memory_space<vmem>>)
    %c1_i32_92 = arith.constant 1 : i32
    %c0_i32_93 = arith.constant 0 : i32
    %176 = arith.addi %c0_i32_93, %c1_i32_92 : i32
    %c8_i32_94 = arith.constant 8 : i32
    %c0_i32_95 = arith.constant 0 : i32
    %177 = arith.cmpi eq, %c8_i32_94, %c0_i32_95 : i32
    %c1_i32_96 = arith.constant 1 : i32
    %178 = arith.select %177, %c1_i32_96, %c8_i32_94 : i32
    %179 = arith.remsi %176, %178 : i32
    %c0_i32_97 = arith.constant 0 : i32
    %180 = arith.cmpi ne, %179, %c0_i32_97 : i32
    %c0_i32_98 = arith.constant 0 : i32
    %181 = arith.cmpi slt, %179, %c0_i32_98 : i32
    %c0_i32_99 = arith.constant 0 : i32
    %182 = arith.cmpi slt, %178, %c0_i32_99 : i32
    %183 = arith.xori %181, %182 : i1
    %184 = arith.andi %183, %180 : i1
    %185 = arith.addi %179, %178 : i32
    %186 = arith.select %184, %185, %179 : i32
    %c0_i32_100 = arith.constant 0 : i32
    %c0_i32_101 = arith.constant 0 : i32
    %187 = tpu.memref_slice %arg2[%c0_i32_100, %c0_i32_101] : memref<64x128xf32, #tpu.memory_space<vmem>> -> memref<1x128xf32, #tpu.memory_space<vmem>>
    %c0_i32_102 = arith.constant 0 : i32
    %188 = tpu.memref_slice %arg3[%176, %c0_i32_102] : memref<8x128xf32, #tpu.memory_space<vmem>> -> memref<1x128xf32, #tpu.memory_space<vmem>>
    %189 = tpu.memref_slice %arg4[%186] : memref<8x!tpu.dma_semaphore, #tpu.memory_space<semaphore_mem>> -> memref<1x!tpu.dma_semaphore, #tpu.memory_space<semaphore_mem>>
    %190 = tpu.memref_squeeze %189 : memref<1x!tpu.dma_semaphore, #tpu.memory_space<semaphore_mem>> -> memref<!tpu.dma_semaphore, #tpu.memory_space<semaphore_mem>>
    tpu.wait_dma2 semaphore(%190 : memref<!tpu.dma_semaphore, #tpu.memory_space<semaphore_mem>>) src(%187 : memref<1x128xf32, #tpu.memory_space<vmem>>) dst(%188 : memref<1x128xf32, #tpu.memory_space<vmem>>)
    %c2_i32_103 = arith.constant 2 : i32
    %c0_i32_104 = arith.constant 0 : i32
    %191 = arith.addi %c0_i32_104, %c2_i32_103 : i32
    %c8_i32_105 = arith.constant 8 : i32
    %c0_i32_106 = arith.constant 0 : i32
    %192 = arith.cmpi eq, %c8_i32_105, %c0_i32_106 : i32
    %c1_i32_107 = arith.constant 1 : i32
    %193 = arith.select %192, %c1_i32_107, %c8_i32_105 : i32
    %194 = arith.remsi %191, %193 : i32
    %c0_i32_108 = arith.constant 0 : i32
    %195 = arith.cmpi ne, %194, %c0_i32_108 : i32
    %c0_i32_109 = arith.constant 0 : i32
    %196 = arith.cmpi slt, %194, %c0_i32_109 : i32
    %c0_i32_110 = arith.constant 0 : i32
    %197 = arith.cmpi slt, %193, %c0_i32_110 : i32
    %198 = arith.xori %196, %197 : i1
    %199 = arith.andi %198, %195 : i1
    %200 = arith.addi %194, %193 : i32
    %201 = arith.select %199, %200, %194 : i32
    %c0_i32_111 = arith.constant 0 : i32
    %c0_i32_112 = arith.constant 0 : i32
    %202 = tpu.memref_slice %arg2[%c0_i32_111, %c0_i32_112] : memref<64x128xf32, #tpu.memory_space<vmem>> -> memref<1x128xf32, #tpu.memory_space<vmem>>
    %c0_i32_113 = arith.constant 0 : i32
    %203 = tpu.memref_slice %arg3[%191, %c0_i32_113] : memref<8x128xf32, #tpu.memory_space<vmem>> -> memref<1x128xf32, #tpu.memory_space<vmem>>
    %204 = tpu.memref_slice %arg4[%201] : memref<8x!tpu.dma_semaphore, #tpu.memory_space<semaphore_mem>> -> memref<1x!tpu.dma_semaphore, #tpu.memory_space<semaphore_mem>>
    %205 = tpu.memref_squeeze %204 : memref<1x!tpu.dma_semaphore, #tpu.memory_space<semaphore_mem>> -> memref<!tpu.dma_semaphore, #tpu.memory_space<semaphore_mem>>
    tpu.wait_dma2 semaphore(%205 : memref<!tpu.dma_semaphore, #tpu.memory_space<semaphore_mem>>) src(%202 : memref<1x128xf32, #tpu.memory_space<vmem>>) dst(%203 : memref<1x128xf32, #tpu.memory_space<vmem>>)
    %c3_i32_114 = arith.constant 3 : i32
    %c0_i32_115 = arith.constant 0 : i32
    %206 = arith.addi %c0_i32_115, %c3_i32_114 : i32
    %c8_i32_116 = arith.constant 8 : i32
    %c0_i32_117 = arith.constant 0 : i32
    %207 = arith.cmpi eq, %c8_i32_116, %c0_i32_117 : i32
    %c1_i32_118 = arith.constant 1 : i32
    %208 = arith.select %207, %c1_i32_118, %c8_i32_116 : i32
    %209 = arith.remsi %206, %208 : i32
    %c0_i32_119 = arith.constant 0 : i32
    %210 = arith.cmpi ne, %209, %c0_i32_119 : i32
    %c0_i32_120 = arith.constant 0 : i32
    %211 = arith.cmpi slt, %209, %c0_i32_120 : i32
    %c0_i32_121 = arith.constant 0 : i32
    %212 = arith.cmpi slt, %208, %c0_i32_121 : i32
    %213 = arith.xori %211, %212 : i1
    %214 = arith.andi %213, %210 : i1
    %215 = arith.addi %209, %208 : i32
    %216 = arith.select %214, %215, %209 : i32
    %c0_i32_122 = arith.constant 0 : i32
    %c0_i32_123 = arith.constant 0 : i32
    %217 = tpu.memref_slice %arg2[%c0_i32_122, %c0_i32_123] : memref<64x128xf32, #tpu.memory_space<vmem>> -> memref<1x128xf32, #tpu.memory_space<vmem>>
    %c0_i32_124 = arith.constant 0 : i32
    %218 = tpu.memref_slice %arg3[%206, %c0_i32_124] : memref<8x128xf32, #tpu.memory_space<vmem>> -> memref<1x128xf32, #tpu.memory_space<vmem>>
    %219 = tpu.memref_slice %arg4[%216] : memref<8x!tpu.dma_semaphore, #tpu.memory_space<semaphore_mem>> -> memref<1x!tpu.dma_semaphore, #tpu.memory_space<semaphore_mem>>
    %220 = tpu.memref_squeeze %219 : memref<1x!tpu.dma_semaphore, #tpu.memory_space<semaphore_mem>> -> memref<!tpu.dma_semaphore, #tpu.memory_space<semaphore_mem>>
    tpu.wait_dma2 semaphore(%220 : memref<!tpu.dma_semaphore, #tpu.memory_space<semaphore_mem>>) src(%217 : memref<1x128xf32, #tpu.memory_space<vmem>>) dst(%218 : memref<1x128xf32, #tpu.memory_space<vmem>>)
    %c4_i32_125 = arith.constant 4 : i32
    %c0_i32_126 = arith.constant 0 : i32
    %221 = arith.addi %c0_i32_126, %c4_i32_125 : i32
    %c8_i32_127 = arith.constant 8 : i32
    %c0_i32_128 = arith.constant 0 : i32
    %222 = arith.cmpi eq, %c8_i32_127, %c0_i32_128 : i32
    %c1_i32_129 = arith.constant 1 : i32
    %223 = arith.select %222, %c1_i32_129, %c8_i32_127 : i32
    %224 = arith.remsi %221, %223 : i32
    %c0_i32_130 = arith.constant 0 : i32
    %225 = arith.cmpi ne, %224, %c0_i32_130 : i32
    %c0_i32_131 = arith.constant 0 : i32
    %226 = arith.cmpi slt, %224, %c0_i32_131 : i32
    %c0_i32_132 = arith.constant 0 : i32
    %227 = arith.cmpi slt, %223, %c0_i32_132 : i32
    %228 = arith.xori %226, %227 : i1
    %229 = arith.andi %228, %225 : i1
    %230 = arith.addi %224, %223 : i32
    %231 = arith.select %229, %230, %224 : i32
    %c0_i32_133 = arith.constant 0 : i32
    %c0_i32_134 = arith.constant 0 : i32
    %232 = tpu.memref_slice %arg2[%c0_i32_133, %c0_i32_134] : memref<64x128xf32, #tpu.memory_space<vmem>> -> memref<1x128xf32, #tpu.memory_space<vmem>>
    %c0_i32_135 = arith.constant 0 : i32
    %233 = tpu.memref_slice %arg3[%221, %c0_i32_135] : memref<8x128xf32, #tpu.memory_space<vmem>> -> memref<1x128xf32, #tpu.memory_space<vmem>>
    %234 = tpu.memref_slice %arg4[%231] : memref<8x!tpu.dma_semaphore, #tpu.memory_space<semaphore_mem>> -> memref<1x!tpu.dma_semaphore, #tpu.memory_space<semaphore_mem>>
    %235 = tpu.memref_squeeze %234 : memref<1x!tpu.dma_semaphore, #tpu.memory_space<semaphore_mem>> -> memref<!tpu.dma_semaphore, #tpu.memory_space<semaphore_mem>>
    tpu.wait_dma2 semaphore(%235 : memref<!tpu.dma_semaphore, #tpu.memory_space<semaphore_mem>>) src(%232 : memref<1x128xf32, #tpu.memory_space<vmem>>) dst(%233 : memref<1x128xf32, #tpu.memory_space<vmem>>)
    %c5_i32_136 = arith.constant 5 : i32
    %c0_i32_137 = arith.constant 0 : i32
    %236 = arith.addi %c0_i32_137, %c5_i32_136 : i32
    %c8_i32_138 = arith.constant 8 : i32
    %c0_i32_139 = arith.constant 0 : i32
    %237 = arith.cmpi eq, %c8_i32_138, %c0_i32_139 : i32
    %c1_i32_140 = arith.constant 1 : i32
    %238 = arith.select %237, %c1_i32_140, %c8_i32_138 : i32
    %239 = arith.remsi %236, %238 : i32
    %c0_i32_141 = arith.constant 0 : i32
    %240 = arith.cmpi ne, %239, %c0_i32_141 : i32
    %c0_i32_142 = arith.constant 0 : i32
    %241 = arith.cmpi slt, %239, %c0_i32_142 : i32
    %c0_i32_143 = arith.constant 0 : i32
    %242 = arith.cmpi slt, %238, %c0_i32_143 : i32
    %243 = arith.xori %241, %242 : i1
    %244 = arith.andi %243, %240 : i1
    %245 = arith.addi %239, %238 : i32
    %246 = arith.select %244, %245, %239 : i32
    %c0_i32_144 = arith.constant 0 : i32
    %c0_i32_145 = arith.constant 0 : i32
    %247 = tpu.memref_slice %arg2[%c0_i32_144, %c0_i32_145] : memref<64x128xf32, #tpu.memory_space<vmem>> -> memref<1x128xf32, #tpu.memory_space<vmem>>
    %c0_i32_146 = arith.constant 0 : i32
    %248 = tpu.memref_slice %arg3[%236, %c0_i32_146] : memref<8x128xf32, #tpu.memory_space<vmem>> -> memref<1x128xf32, #tpu.memory_space<vmem>>
    %249 = tpu.memref_slice %arg4[%246] : memref<8x!tpu.dma_semaphore, #tpu.memory_space<semaphore_mem>> -> memref<1x!tpu.dma_semaphore, #tpu.memory_space<semaphore_mem>>
    %250 = tpu.memref_squeeze %249 : memref<1x!tpu.dma_semaphore, #tpu.memory_space<semaphore_mem>> -> memref<!tpu.dma_semaphore, #tpu.memory_space<semaphore_mem>>
    tpu.wait_dma2 semaphore(%250 : memref<!tpu.dma_semaphore, #tpu.memory_space<semaphore_mem>>) src(%247 : memref<1x128xf32, #tpu.memory_space<vmem>>) dst(%248 : memref<1x128xf32, #tpu.memory_space<vmem>>)
    %c6_i32_147 = arith.constant 6 : i32
    %c0_i32_148 = arith.constant 0 : i32
    %251 = arith.addi %c0_i32_148, %c6_i32_147 : i32
    %c8_i32_149 = arith.constant 8 : i32
    %c0_i32_150 = arith.constant 0 : i32
    %252 = arith.cmpi eq, %c8_i32_149, %c0_i32_150 : i32
    %c1_i32_151 = arith.constant 1 : i32
    %253 = arith.select %252, %c1_i32_151, %c8_i32_149 : i32
    %254 = arith.remsi %251, %253 : i32
    %c0_i32_152 = arith.constant 0 : i32
    %255 = arith.cmpi ne, %254, %c0_i32_152 : i32
    %c0_i32_153 = arith.constant 0 : i32
    %256 = arith.cmpi slt, %254, %c0_i32_153 : i32
    %c0_i32_154 = arith.constant 0 : i32
    %257 = arith.cmpi slt, %253, %c0_i32_154 : i32
    %258 = arith.xori %256, %257 : i1
    %259 = arith.andi %258, %255 : i1
    %260 = arith.addi %254, %253 : i32
    %261 = arith.select %259, %260, %254 : i32
    %c0_i32_155 = arith.constant 0 : i32
    %c0_i32_156 = arith.constant 0 : i32
    %262 = tpu.memref_slice %arg2[%c0_i32_155, %c0_i32_156] : memref<64x128xf32, #tpu.memory_space<vmem>> -> memref<1x128xf32, #tpu.memory_space<vmem>>
    %c0_i32_157 = arith.constant 0 : i32
    %263 = tpu.memref_slice %arg3[%251, %c0_i32_157] : memref<8x128xf32, #tpu.memory_space<vmem>> -> memref<1x128xf32, #tpu.memory_space<vmem>>
    %264 = tpu.memref_slice %arg4[%261] : memref<8x!tpu.dma_semaphore, #tpu.memory_space<semaphore_mem>> -> memref<1x!tpu.dma_semaphore, #tpu.memory_space<semaphore_mem>>
    %265 = tpu.memref_squeeze %264 : memref<1x!tpu.dma_semaphore, #tpu.memory_space<semaphore_mem>> -> memref<!tpu.dma_semaphore, #tpu.memory_space<semaphore_mem>>
    tpu.wait_dma2 semaphore(%265 : memref<!tpu.dma_semaphore, #tpu.memory_space<semaphore_mem>>) src(%262 : memref<1x128xf32, #tpu.memory_space<vmem>>) dst(%263 : memref<1x128xf32, #tpu.memory_space<vmem>>)
    %c7_i32_158 = arith.constant 7 : i32
    %c0_i32_159 = arith.constant 0 : i32
    %266 = arith.addi %c0_i32_159, %c7_i32_158 : i32
    %c8_i32_160 = arith.constant 8 : i32
    %c0_i32_161 = arith.constant 0 : i32
    %267 = arith.cmpi eq, %c8_i32_160, %c0_i32_161 : i32
    %c1_i32_162 = arith.constant 1 : i32
    %268 = arith.select %267, %c1_i32_162, %c8_i32_160 : i32
    %269 = arith.remsi %266, %268 : i32
    %c0_i32_163 = arith.constant 0 : i32
    %270 = arith.cmpi ne, %269, %c0_i32_163 : i32
    %c0_i32_164 = arith.constant 0 : i32
    %271 = arith.cmpi slt, %269, %c0_i32_164 : i32
    %c0_i32_165 = arith.constant 0 : i32
    %272 = arith.cmpi slt, %268, %c0_i32_165 : i32
    %273 = arith.xori %271, %272 : i1
    %274 = arith.andi %273, %270 : i1
    %275 = arith.addi %269, %268 : i32
    %276 = arith.select %274, %275, %269 : i32
    %c0_i32_166 = arith.constant 0 : i32
    %c0_i32_167 = arith.constant 0 : i32
    %277 = tpu.memref_slice %arg2[%c0_i32_166, %c0_i32_167] : memref<64x128xf32, #tpu.memory_space<vmem>> -> memref<1x128xf32, #tpu.memory_space<vmem>>
    %c0_i32_168 = arith.constant 0 : i32
    %278 = tpu.memref_slice %arg3[%266, %c0_i32_168] : memref<8x128xf32, #tpu.memory_space<vmem>> -> memref<1x128xf32, #tpu.memory_space<vmem>>
    %279 = tpu.memref_slice %arg4[%276] : memref<8x!tpu.dma_semaphore, #tpu.memory_space<semaphore_mem>> -> memref<1x!tpu.dma_semaphore, #tpu.memory_space<semaphore_mem>>
    %280 = tpu.memref_squeeze %279 : memref<1x!tpu.dma_semaphore, #tpu.memory_space<semaphore_mem>> -> memref<!tpu.dma_semaphore, #tpu.memory_space<semaphore_mem>>
    tpu.wait_dma2 semaphore(%280 : memref<!tpu.dma_semaphore, #tpu.memory_space<semaphore_mem>>) src(%277 : memref<1x128xf32, #tpu.memory_space<vmem>>) dst(%278 : memref<1x128xf32, #tpu.memory_space<vmem>>)
    %c8_i32_169 = arith.constant 8 : i32
    return
  }
  func.func @transform_0(%arg0: i32, %arg1: memref<16xi32, #tpu.memory_space<smem>>) -> (i32, i32) {
    %c0_i32 = arith.constant 0 : i32
    %c0_i32_0 = arith.constant 0 : i32
    %c0_i32_1 = arith.constant 0 : i32
    return %c0_i32, %c0_i32_0 : i32, i32
  }
  func.func @transform_1(%arg0: i32, %arg1: memref<16xi32, #tpu.memory_space<smem>>) -> (i32, i32) {
    %c0_i32 = arith.constant 0 : i32
    %c0_i32_0 = arith.constant 0 : i32
    return %arg0, %c0_i32 : i32, i32
  }
}

</mosaic_0001>

<llo_original>
// kernel: tpu_custom_call.1
$region0: #{tpu_custom_call.1}
  #allocation0 [shape = 'u32[]', space=smem, size = 0x4, offset = 0x4, fixed_abs, tag = 'smem constant byte address 0x4 - core index']
  #allocation1 [shape = 'u32[72,128]{1,0:T(1,128)}', space=vmem, size = 0x9000, scoped, tag = 'internal scratch']
  #allocation2 [shape = 's32[8]{0}', space=sflag, size = 0x20, scoped, tag = 'scratch operand']
  #allocation3 [shape = 's32[1]{0}', space=sflag, size = 0x4, scoped, tag = 'scoped memory for tpu_custom_call.1']
  #allocation4 [shape = 'u8[512]{0}', space=smem, size = 0x200, scoped, tag = 'prefetched SMEM operand 0']
  #allocation9 [shape = 's32[]', space=sflag, size = 0x4, offset = 0, fixed_abs, tag = 'sflag constant byte address 0x0 - dummy sync flag']
  #allocation10 [shape = 's32[]', space=sflag, size = 0x4, offset = 0, fixed_abs, tag = 'sflag constant byte address 0x0 - dummy sync flag']
  #allocation11 [shape = 's32[]', space=sflag, size = 0x4, offset = 0, fixed_abs, tag = 'sflag constant byte address 0x0 - dummy sync flag']
  #allocation12 [shape = 's32[]', space=sflag, size = 0x4, offset = 0, fixed_abs, tag = 'sflag constant byte address 0x0 - dummy sync flag']
  #allocation13 [shape = 's32[]', space=sflag, size = 0x4, offset = 0, fixed_abs, tag = 'sflag constant byte address 0x0 - dummy sync flag']
  #allocation14 [shape = 's32[]', space=sflag, size = 0x4, offset = 0, fixed_abs, tag = 'sflag constant byte address 0x0 - dummy sync flag']
  #allocation15 [shape = 's32[]', space=sflag, size = 0x4, offset = 0, fixed_abs, tag = 'sflag constant byte address 0x0 - dummy sync flag']
  #allocation16 [shape = 's32[]', space=sflag, size = 0x4, offset = 0, fixed_abs, tag = 'sflag constant byte address 0x0 - dummy sync flag']
  %s0 = inlined_call_operand.hbm [shape: s32[16], index: 0, kind: input, shape index: {}]
  %s1 = inlined_call_operand.hbm [shape: f32[64,128], index: 1, kind: input, shape index: {}]
  %s2 = inlined_call_operand.hbm [shape: f32[16,128], index: 2, kind: output, shape index: {}]
  %s3 = sld [smem:[#allocation0]]
  $region281: #{tpu_custom_call.1} parent=0
    _
  %s5 = ssub.s32 1, %s3
  %s6 = scalar_select 0, %s5, %s3
  %s8 = sshll.u32 %s0, 4
  %s9 = int_to_ptr.hbm [resolvable:$true] %s8
  %11 = dma.hbm_to_smem %s9, 16, [#allocation4], [#allocation3]
  %13 = dma.done [#allocation3], 16
  %14 = sfence
  $region1: #{tpu_custom_call.1} parent=0
    #allocation5 [shape = 'u8[32768]{0}', space=vmem, size = 0x8000, scoped, tag = 'input window, operand 1, single buffered']
    #allocation6 [shape = 's32[2]{0}', space=sflag, size = 0x8, scoped, tag = 'scoped memory for tpu_custom_call.1']
    #allocation7 [shape = 's32[2]{0}', space=sflag, size = 0x8, scoped, tag = 'scoped memory for tpu_custom_call.1']
    #allocation8 [shape = 'u8[8192]{0}', space=vmem, size = 0x2000, scoped, tag = 'output window, operand 0']
    %15 = vsyncpa [#allocation6], 0
    %16 = vsyncpa [#allocation7], 0
    %s17 = scalar_lea.sflag [#allocation7], 1
    %18 = vsyncpa %s17, 0
    loop: start=0, step=1, limit=4
    $region2: #{tpu_custom_call.1} parent=1 // loop_pre_header
      _
    $region3: #{tpu_custom_call.1} parent=1 // loop_header
      %s20 = sphi 0, %s24
      %p21 = scmp.ge.s32.totalorder %s20, 4
      %s28 = sphi 0, %s28
      %s30 = sphi 0, %s28
      %s31 = sphi 0, %s30
      %s45 = sphi 0, %s31
      %s51 = sphi 0, %s53
      %s54 = sphi 0, %s51
      %s55 = sphi 0, %s54
      %s71 = sphi 0, %s55
    $region4: #{tpu_custom_call.1} parent=1 // loop_header_branch
      %23 = sbr.rel (%p21) target = $region8
    $region5: #{tpu_custom_call.1} parent=1 // loop_body
      %s25 = ssub.s32 %s20, 1
      %s26 = ssub.s32 %s20, 2
      %s27 = sadd.s32 %s20, 1
      %s29 = sadd.s32 %s28, 1
      %p32 = scmp.eq.s32.totalorder %s20, 1
      %p33 = scmp.ne.s32.totalorder %s28, %s30
      %p34 = scmp.eq.s32.totalorder %s20, 0
      %p35 = por %p33, %p34
      %p36 = scmp.ne.s32.totalorder %s28, %s30
      %p37 = scmp.eq.s32.totalorder %s25, 1
      %p38 = por %p36, %p37
      %p39 = scmp.ne.s32.totalorder %s30, %s31
      %p40 = scmp.eq.s32.totalorder %s25, 0
      %p41 = por %p39, %p40
      %p42 = scmp.ne.s32.totalorder %s30, %s31
      %p43 = scmp.eq.s32.totalorder %s26, 1
      %p44 = por %p42, %p43
      %p46 = scmp.ne.s32.totalorder %s31, %s45
      %p47 = scmp.eq.s32.totalorder %s26, 0
      %p48 = por %p46, %p47
      %s49 = ssub.s32 %s20, %s27
      %p50 = scmp.eq.s32.totalorder %s49, 0
      %s52 = sadd.s32 %s51, 1
      %s53 = scalar_select %p50, %s51, %s52
      %p56 = pneg %p50
      %p57 = scmp.eq.s32.totalorder %s20, 1
      %p58 = por %p56, %p57
      %p59 = scmp.ne.s32.totalorder %s51, %s54
      %p60 = scmp.eq.s32.totalorder %s20, 0
      %p61 = por %p59, %p60
      %p62 = scmp.ne.s32.totalorder %s51, %s54
      %p63 = scmp.eq.s32.totalorder %s25, 1
      %p64 = por %p62, %p63
      %p65 = scmp.ne.s32.totalorder %s54, %s55
      %p66 = scmp.eq.s32.totalorder %s25, 0
      %p67 = por %p65, %p66
      %p68 = scmp.ne.s32.totalorder %s54, %s55
      %p69 = scmp.eq.s32.totalorder %s26, 1
      %p70 = por %p68, %p69
      %p72 = scmp.ne.s32.totalorder %s55, %s71
      %p73 = scmp.eq.s32.totalorder %s26, 0
      %p74 = por %p72, %p73
      %p75 = scmp.le.s32.totalorder 1, %s20
      %p76 = scmp.lt.s32.totalorder %s20, 3
      %p77 = pnand %p75, %p76
      %p78 = pneg %p77
      // Predicated region
      $region9: #{tpu_custom_call.1} parent=5 // pred_check
        _
      $region10: #{tpu_custom_call.1} parent=5 // pred_check_branch
        %80 = sbr.rel (%p77) target = $region12
      $region11: #{tpu_custom_call.1} parent=5 // pred_region
        %s81 = ssub.s32 %s20, 1
        // Predicated region
        $region13: #{tpu_custom_call.1} parent=11 // pred_check
          %p82 = pneg %p41
        $region14: #{tpu_custom_call.1} parent=11 // pred_check_branch
          %84 = sbr.rel (%p82) target = $region16
        $region15: #{tpu_custom_call.1} parent=11 // pred_region
          %86 = vsyncadd [#allocation6], 0
          %s87 = sshll.u32 %s1, 4
          %s88 = int_to_ptr.hbm [resolvable:$true] %s87
          %s89 = sshll.u32 [#allocation5], 4
          %s90 = int_to_ptr.vmem [resolvable:$true] %s89
          %95 = dma.hbm_to_vmem [thread:$0]  %s88, 1024, %s90, [#allocation6], 128, 128, 8
        $region16: #{tpu_custom_call.1} parent=11 // pred_fallthru
          _
      $region12: #{tpu_custom_call.1} parent=5 // pred_fallthru
        _
      %p96 = scmp.lt.s32.totalorder %s20, 2
      // Predicated region
      $region17: #{tpu_custom_call.1} parent=5 // pred_check
        %p97 = pneg %p96
      $region18: #{tpu_custom_call.1} parent=5 // pred_check_branch
        %99 = sbr.rel (%p97) target = $region20
      $region19: #{tpu_custom_call.1} parent=5 // pred_region
        _
      $region20: #{tpu_custom_call.1} parent=5 // pred_fallthru
        _
      %p100 = scmp.le.s32.totalorder 1, %s20
      %p101 = scmp.lt.s32.totalorder %s20, 3
      %p102 = pnand %p100, %p101
      %p103 = pneg %p102
      // Predicated region
      $region21: #{tpu_custom_call.1} parent=5 // pred_check
        _
      $region22: #{tpu_custom_call.1} parent=5 // pred_check_branch
        %105 = sbr.rel (%p102) target = $region24
      $region23: #{tpu_custom_call.1} parent=5 // pred_region
        %s106 = ssub.s32 %s20, 1
        // Predicated region
        $region25: #{tpu_custom_call.1} parent=23 // pred_check
          %p107 = pneg %p41
        $region26: #{tpu_custom_call.1} parent=23 // pred_check_branch
          %109 = sbr.rel (%p107) target = $region28
        $region27: #{tpu_custom_call.1} parent=23 // pred_region
          %111 = dma.done [#allocation6], 1024
        $region28: #{tpu_custom_call.1} parent=23 // pred_fallthru
          _
        %p112 = pneg %p41
        %p113 = pneg %p38
        %p114 = pneg %p67
        %p115 = pneg %p64
        %s116 = sand.u32 %s54, 1
        %s117 = scalar_lea.sflag [#allocation7], %s116
        %s118 = sand.u32 %s54, 1
        %s119 = smul.addr %s118, 8
        %s120 = scalar_lea.vmem [#allocation8], %s119
        %s121 = smul.u32 %s25, 8
        %s122 = sld [smem:[#allocation4 + %s121]]
        %s123 = scalar_lea.vmem [#allocation5], %s122
        // Predicated region
        $region29: #{tpu_custom_call.1} parent=23 // pred_check
          _
        $region30: #{tpu_custom_call.1} parent=23 // pred_check_branch
          %125 = sbr.rel target = $region32
        $region31: #{tpu_custom_call.1} parent=23 // pred_region
          // Predicated region
          $region44: #{tpu_custom_call.1} parent=31 // pred_check
            _
          $region45: #{tpu_custom_call.1} parent=31 // pred_check_branch
            %141 = sbr.rel (0) target = $region47
          $region46: #{tpu_custom_call.1} parent=31 // pred_region
            %s143 = ssub.s32 2, 1
            loop: start=0, step=1, limit=1
            $region48: #{tpu_custom_call.1} parent=46 // loop_pre_header
              _
            $region49: #{tpu_custom_call.1} parent=46 // loop_header
              %s145 = sphi 0, %s149
              %p146 = scmp.ge.s32.totalorder %s145, 1
              %s150 = sphi %s123, %s123
              %s151 = sphi %s120, %s120
            $region50: #{tpu_custom_call.1} parent=46 // loop_header_branch
              %148 = sbr.rel (%p146) target = $region54
            $region51: #{tpu_custom_call.1} parent=46 // loop_body
              %v152 = vld [vmem:[%s150] sm:%s143]
              %153 = vst [vmem:[%s151] sm:%s143] %v152
            $region52: #{tpu_custom_call.1} parent=46 // loop_footer
              %s149 = sadd.s32 1, %s145
            $region53: #{tpu_custom_call.1} parent=46 // loop_footer_branch
              %144 = sbr.rel target = $region49
            $region54: #{tpu_custom_call.1} parent=46 // loop_exit
              _
          $region47: #{tpu_custom_call.1} parent=31 // pred_fallthru
            _
        $region32: #{tpu_custom_call.1} parent=23 // pred_fallthru
          _
        // Predicated region
        $region33: #{tpu_custom_call.1} parent=23 // pred_check
          _
        $region34: #{tpu_custom_call.1} parent=23 // pred_check_branch
          %127 = sbr.rel (0) target = $region36
        $region35: #{tpu_custom_call.1} parent=23 // pred_region
          %s129 = ssub.s32 2, 1
          loop: start=0, step=1, limit=1
          $region37: #{tpu_custom_call.1} parent=35 // loop_pre_header
            _
          $region38: #{tpu_custom_call.1} parent=35 // loop_header
            %s131 = sphi 0, %s135
            %p132 = scmp.ge.s32.totalorder %s131, 1
            %s136 = sphi %s123, %s123
            %s137 = sphi %s120, %s120
          $region39: #{tpu_custom_call.1} parent=35 // loop_header_branch
            %134 = sbr.rel (%p132) target = $region43
          $region40: #{tpu_custom_call.1} parent=35 // loop_body
            %v138 = vld [vmem:[%s136] sm:%s129]
            %139 = vst [vmem:[%s137] sm:%s129] %v138
          $region41: #{tpu_custom_call.1} parent=35 // loop_footer
            %s135 = sadd.s32 1, %s131
          $region42: #{tpu_custom_call.1} parent=35 // loop_footer_branch
            %130 = sbr.rel target = $region38
          $region43: #{tpu_custom_call.1} parent=35 // loop_exit
            _
        $region36: #{tpu_custom_call.1} parent=23 // pred_fallthru
          _
        // Predicated region
        $region55: #{tpu_custom_call.1} parent=23 // pred_check
          _
        $region56: #{tpu_custom_call.1} parent=23 // pred_check_branch
          %156 = sbr.rel (0) target = $region58
        $region57: #{tpu_custom_call.1} parent=23 // pred_region
          %157 = vsyncadd [#allocation2], 16
        $region58: #{tpu_custom_call.1} parent=23 // pred_fallthru
          _
        %s158 = sadd.s32 %s121, 1
        %s159 = sld [smem:[#allocation4 + %s158]]
        %s160 = scalar_lea.vmem [#allocation5], %s159
        %s161 = scalar_lea.vmem %s120, 1 [#allocation8]
        %s162 = scalar_lea.sflag [#allocation2], 1
        // Predicated region
        $region59: #{tpu_custom_call.1} parent=23 // pred_check
          _
        $region60: #{tpu_custom_call.1} parent=23 // pred_check_branch
          %164 = sbr.rel target = $region62
        $region61: #{tpu_custom_call.1} parent=23 // pred_region
          // Predicated region
          $region74: #{tpu_custom_call.1} parent=61 // pred_check
            _
          $region75: #{tpu_custom_call.1} parent=61 // pred_check_branch
            %180 = sbr.rel (0) target = $region77
          $region76: #{tpu_custom_call.1} parent=61 // pred_region
            %s182 = ssub.s32 2, 1
            loop: start=0, step=1, limit=1
            $region78: #{tpu_custom_call.1} parent=76 // loop_pre_header
              _
            $region79: #{tpu_custom_call.1} parent=76 // loop_header
              %s184 = sphi 0, %s188
              %p185 = scmp.ge.s32.totalorder %s184, 1
              %s189 = sphi %s160, %s160
              %s190 = sphi %s161, %s161
            $region80: #{tpu_custom_call.1} parent=76 // loop_header_branch
              %187 = sbr.rel (%p185) target = $region84
            $region81: #{tpu_custom_call.1} parent=76 // loop_body
              %v191 = vld [vmem:[%s189] sm:%s182]
              %192 = vst [vmem:[%s190] sm:%s182] %v191
            $region82: #{tpu_custom_call.1} parent=76 // loop_footer
              %s188 = sadd.s32 1, %s184
            $region83: #{tpu_custom_call.1} parent=76 // loop_footer_branch
              %183 = sbr.rel target = $region79
            $region84: #{tpu_custom_call.1} parent=76 // loop_exit
              _
          $region77: #{tpu_custom_call.1} parent=61 // pred_fallthru
            _
        $region62: #{tpu_custom_call.1} parent=23 // pred_fallthru
          _
        // Predicated region
        $region63: #{tpu_custom_call.1} parent=23 // pred_check
          _
        $region64: #{tpu_custom_call.1} parent=23 // pred_check_branch
          %166 = sbr.rel (0) target = $region66
        $region65: #{tpu_custom_call.1} parent=23 // pred_region
          %s168 = ssub.s32 2, 1
          loop: start=0, step=1, limit=1
          $region67: #{tpu_custom_call.1} parent=65 // loop_pre_header
            _
          $region68: #{tpu_custom_call.1} parent=65 // loop_header
            %s170 = sphi 0, %s174
            %p171 = scmp.ge.s32.totalorder %s170, 1
            %s175 = sphi %s160, %s160
            %s176 = sphi %s161, %s161
          $region69: #{tpu_custom_call.1} parent=65 // loop_header_branch
            %173 = sbr.rel (%p171) target = $region73
          $region70: #{tpu_custom_call.1} parent=65 // loop_body
            %v177 = vld [vmem:[%s175] sm:%s168]
            %178 = vst [vmem:[%s176] sm:%s168] %v177
          $region71: #{tpu_custom_call.1} parent=65 // loop_footer
            %s174 = sadd.s32 1, %s170
          $region72: #{tpu_custom_call.1} parent=65 // loop_footer_branch
            %169 = sbr.rel target = $region68
          $region73: #{tpu_custom_call.1} parent=65 // loop_exit
            _
        $region66: #{tpu_custom_call.1} parent=23 // pred_fallthru
          _
        // Predicated region
        $region85: #{tpu_custom_call.1} parent=23 // pred_check
          _
        $region86: #{tpu_custom_call.1} parent=23 // pred_check_branch
          %195 = sbr.rel (0) target = $region88
        $region87: #{tpu_custom_call.1} parent=23 // pred_region
          %196 = vsyncadd %s162, 16
        $region88: #{tpu_custom_call.1} parent=23 // pred_fallthru
          _
        %s197 = sadd.s32 %s121, 2
        %s198 = sld [smem:[#allocation4 + %s197]]
        %s199 = scalar_lea.vmem [#allocation5], %s198
        %s200 = scalar_lea.vmem %s120, 2 [#allocation8]
        %s201 = scalar_lea.sflag [#allocation2], 2
        // Predicated region
        $region89: #{tpu_custom_call.1} parent=23 // pred_check
          _
        $region90: #{tpu_custom_call.1} parent=23 // pred_check_branch
          %203 = sbr.rel target = $region92
        $region91: #{tpu_custom_call.1} parent=23 // pred_region
          // Predicated region
          $region104: #{tpu_custom_call.1} parent=91 // pred_check
            _
          $region105: #{tpu_custom_call.1} parent=91 // pred_check_branch
            %219 = sbr.rel (0) target = $region107
          $region106: #{tpu_custom_call.1} parent=91 // pred_region
            %s221 = ssub.s32 2, 1
            loop: start=0, step=1, limit=1
            $region108: #{tpu_custom_call.1} parent=106 // loop_pre_header
              _
            $region109: #{tpu_custom_call.1} parent=106 // loop_header
              %s223 = sphi 0, %s227
              %p224 = scmp.ge.s32.totalorder %s223, 1
              %s228 = sphi %s199, %s199
              %s229 = sphi %s200, %s200
            $region110: #{tpu_custom_call.1} parent=106 // loop_header_branch
              %226 = sbr.rel (%p224) target = $region114
            $region111: #{tpu_custom_call.1} parent=106 // loop_body
              %v230 = vld [vmem:[%s228] sm:%s221]
              %231 = vst [vmem:[%s229] sm:%s221] %v230
            $region112: #{tpu_custom_call.1} parent=106 // loop_footer
              %s227 = sadd.s32 1, %s223
            $region113: #{tpu_custom_call.1} parent=106 // loop_footer_branch
              %222 = sbr.rel target = $region109
            $region114: #{tpu_custom_call.1} parent=106 // loop_exit
              _
          $region107: #{tpu_custom_call.1} parent=91 // pred_fallthru
            _
        $region92: #{tpu_custom_call.1} parent=23 // pred_fallthru
          _
        // Predicated region
        $region93: #{tpu_custom_call.1} parent=23 // pred_check
          _
        $region94: #{tpu_custom_call.1} parent=23 // pred_check_branch
          %205 = sbr.rel (0) target = $region96
        $region95: #{tpu_custom_call.1} parent=23 // pred_region
          %s207 = ssub.s32 2, 1
          loop: start=0, step=1, limit=1
          $region97: #{tpu_custom_call.1} parent=95 // loop_pre_header
            _
          $region98: #{tpu_custom_call.1} parent=95 // loop_header
            %s209 = sphi 0, %s213
            %p210 = scmp.ge.s32.totalorder %s209, 1
            %s214 = sphi %s199, %s199
            %s215 = sphi %s200, %s200
          $region99: #{tpu_custom_call.1} parent=95 // loop_header_branch
            %212 = sbr.rel (%p210) target = $region103
          $region100: #{tpu_custom_call.1} parent=95 // loop_body
            %v216 = vld [vmem:[%s214] sm:%s207]
            %217 = vst [vmem:[%s215] sm:%s207] %v216
          $region101: #{tpu_custom_call.1} parent=95 // loop_footer
            %s213 = sadd.s32 1, %s209
          $region102: #{tpu_custom_call.1} parent=95 // loop_footer_branch
            %208 = sbr.rel target = $region98
          $region103: #{tpu_custom_call.1} parent=95 // loop_exit
            _
        $region96: #{tpu_custom_call.1} parent=23 // pred_fallthru
          _
        // Predicated region
        $region115: #{tpu_custom_call.1} parent=23 // pred_check
          _
        $region116: #{tpu_custom_call.1} parent=23 // pred_check_branch
          %234 = sbr.rel (0) target = $region118
        $region117: #{tpu_custom_call.1} parent=23 // pred_region
          %235 = vsyncadd %s201, 16
        $region118: #{tpu_custom_call.1} parent=23 // pred_fallthru
          _
        %s236 = sadd.s32 %s121, 3
        %s237 = sld [smem:[#allocation4 + %s236]]
        %s238 = scalar_lea.vmem [#allocation5], %s237
        %s239 = scalar_lea.vmem %s120, 3 [#allocation8]
        %s240 = scalar_lea.sflag [#allocation2], 3
        // Predicated region
        $region119: #{tpu_custom_call.1} parent=23 // pred_check
          _
        $region120: #{tpu_custom_call.1} parent=23 // pred_check_branch
          %242 = sbr.rel target = $region122
        $region121: #{tpu_custom_call.1} parent=23 // pred_region
          // Predicated region
          $region134: #{tpu_custom_call.1} parent=121 // pred_check
            _
          $region135: #{tpu_custom_call.1} parent=121 // pred_check_branch
            %258 = sbr.rel (0) target = $region137
          $region136: #{tpu_custom_call.1} parent=121 // pred_region
            %s260 = ssub.s32 2, 1
            loop: start=0, step=1, limit=1
            $region138: #{tpu_custom_call.1} parent=136 // loop_pre_header
              _
            $region139: #{tpu_custom_call.1} parent=136 // loop_header
              %s262 = sphi 0, %s266
              %p263 = scmp.ge.s32.totalorder %s262, 1
              %s267 = sphi %s238, %s238
              %s268 = sphi %s239, %s239
            $region140: #{tpu_custom_call.1} parent=136 // loop_header_branch
              %265 = sbr.rel (%p263) target = $region144
            $region141: #{tpu_custom_call.1} parent=136 // loop_body
              %v269 = vld [vmem:[%s267] sm:%s260]
              %270 = vst [vmem:[%s268] sm:%s260] %v269
            $region142: #{tpu_custom_call.1} parent=136 // loop_footer
              %s266 = sadd.s32 1, %s262
            $region143: #{tpu_custom_call.1} parent=136 // loop_footer_branch
              %261 = sbr.rel target = $region139
            $region144: #{tpu_custom_call.1} parent=136 // loop_exit
              _
          $region137: #{tpu_custom_call.1} parent=121 // pred_fallthru
            _
        $region122: #{tpu_custom_call.1} parent=23 // pred_fallthru
          _
        // Predicated region
        $region123: #{tpu_custom_call.1} parent=23 // pred_check
          _
        $region124: #{tpu_custom_call.1} parent=23 // pred_check_branch
          %244 = sbr.rel (0) target = $region126
        $region125: #{tpu_custom_call.1} parent=23 // pred_region
          %s246 = ssub.s32 2, 1
          loop: start=0, step=1, limit=1
          $region127: #{tpu_custom_call.1} parent=125 // loop_pre_header
            _
          $region128: #{tpu_custom_call.1} parent=125 // loop_header
            %s248 = sphi 0, %s252
            %p249 = scmp.ge.s32.totalorder %s248, 1
            %s253 = sphi %s238, %s238
            %s254 = sphi %s239, %s239
          $region129: #{tpu_custom_call.1} parent=125 // loop_header_branch
            %251 = sbr.rel (%p249) target = $region133
          $region130: #{tpu_custom_call.1} parent=125 // loop_body
            %v255 = vld [vmem:[%s253] sm:%s246]
            %256 = vst [vmem:[%s254] sm:%s246] %v255
          $region131: #{tpu_custom_call.1} parent=125 // loop_footer
            %s252 = sadd.s32 1, %s248
          $region132: #{tpu_custom_call.1} parent=125 // loop_footer_branch
            %247 = sbr.rel target = $region128
          $region133: #{tpu_custom_call.1} parent=125 // loop_exit
            _
        $region126: #{tpu_custom_call.1} parent=23 // pred_fallthru
          _
        // Predicated region
        $region145: #{tpu_custom_call.1} parent=23 // pred_check
          _
        $region146: #{tpu_custom_call.1} parent=23 // pred_check_branch
          %273 = sbr.rel (0) target = $region148
        $region147: #{tpu_custom_call.1} parent=23 // pred_region
          %274 = vsyncadd %s240, 16
        $region148: #{tpu_custom_call.1} parent=23 // pred_fallthru
          _
        %s275 = sadd.s32 %s121, 4
        %s276 = sld [smem:[#allocation4 + %s275]]
        %s277 = scalar_lea.vmem [#allocation5], %s276
        %s278 = scalar_lea.vmem %s120, 4 [#allocation8]
        %s279 = scalar_lea.sflag [#allocation2], 4
        // Predicated region
        $region149: #{tpu_custom_call.1} parent=23 // pred_check
          _
        $region150: #{tpu_custom_call.1} parent=23 // pred_check_branch
          %281 = sbr.rel target = $region152
        $region151: #{tpu_custom_call.1} parent=23 // pred_region
          // Predicated region
          $region164: #{tpu_custom_call.1} parent=151 // pred_check
            _
          $region165: #{tpu_custom_call.1} parent=151 // pred_check_branch
            %297 = sbr.rel (0) target = $region167
          $region166: #{tpu_custom_call.1} parent=151 // pred_region
            %s299 = ssub.s32 2, 1
            loop: start=0, step=1, limit=1
            $region168: #{tpu_custom_call.1} parent=166 // loop_pre_header
              _
            $region169: #{tpu_custom_call.1} parent=166 // loop_header
              %s301 = sphi 0, %s305
              %p302 = scmp.ge.s32.totalorder %s301, 1
              %s306 = sphi %s277, %s277
              %s307 = sphi %s278, %s278
            $region170: #{tpu_custom_call.1} parent=166 // loop_header_branch
              %304 = sbr.rel (%p302) target = $region174
            $region171: #{tpu_custom_call.1} parent=166 // loop_body
              %v308 = vld [vmem:[%s306] sm:%s299]
              %309 = vst [vmem:[%s307] sm:%s299] %v308
            $region172: #{tpu_custom_call.1} parent=166 // loop_footer
              %s305 = sadd.s32 1, %s301
            $region173: #{tpu_custom_call.1} parent=166 // loop_footer_branch
              %300 = sbr.rel target = $region169
            $region174: #{tpu_custom_call.1} parent=166 // loop_exit
              _
          $region167: #{tpu_custom_call.1} parent=151 // pred_fallthru
            _
        $region152: #{tpu_custom_call.1} parent=23 // pred_fallthru
          _
        // Predicated region
        $region153: #{tpu_custom_call.1} parent=23 // pred_check
          _
        $region154: #{tpu_custom_call.1} parent=23 // pred_check_branch
          %283 = sbr.rel (0) target = $region156
        $region155: #{tpu_custom_call.1} parent=23 // pred_region
          %s285 = ssub.s32 2, 1
          loop: start=0, step=1, limit=1
          $region157: #{tpu_custom_call.1} parent=155 // loop_pre_header
            _
          $region158: #{tpu_custom_call.1} parent=155 // loop_header
            %s287 = sphi 0, %s291
            %p288 = scmp.ge.s32.totalorder %s287, 1
            %s292 = sphi %s277, %s277
            %s293 = sphi %s278, %s278
          $region159: #{tpu_custom_call.1} parent=155 // loop_header_branch
            %290 = sbr.rel (%p288) target = $region163
          $region160: #{tpu_custom_call.1} parent=155 // loop_body
            %v294 = vld [vmem:[%s292] sm:%s285]
            %295 = vst [vmem:[%s293] sm:%s285] %v294
          $region161: #{tpu_custom_call.1} parent=155 // loop_footer
            %s291 = sadd.s32 1, %s287
          $region162: #{tpu_custom_call.1} parent=155 // loop_footer_branch
            %286 = sbr.rel target = $region158
          $region163: #{tpu_custom_call.1} parent=155 // loop_exit
            _
        $region156: #{tpu_custom_call.1} parent=23 // pred_fallthru
          _
        // Predicated region
        $region175: #{tpu_custom_call.1} parent=23 // pred_check
          _
        $region176: #{tpu_custom_call.1} parent=23 // pred_check_branch
          %312 = sbr.rel (0) target = $region178
        $region177: #{tpu_custom_call.1} parent=23 // pred_region
          %313 = vsyncadd %s279, 16
        $region178: #{tpu_custom_call.1} parent=23 // pred_fallthru
          _
        %s314 = sadd.s32 %s121, 5
        %s315 = sld [smem:[#allocation4 + %s314]]
        %s316 = scalar_lea.vmem [#allocation5], %s315
        %s317 = scalar_lea.vmem %s120, 5 [#allocation8]
        %s318 = scalar_lea.sflag [#allocation2], 5
        // Predicated region
        $region179: #{tpu_custom_call.1} parent=23 // pred_check
          _
        $region180: #{tpu_custom_call.1} parent=23 // pred_check_branch
          %320 = sbr.rel target = $region182
        $region181: #{tpu_custom_call.1} parent=23 // pred_region
          // Predicated region
          $region194: #{tpu_custom_call.1} parent=181 // pred_check
            _
          $region195: #{tpu_custom_call.1} parent=181 // pred_check_branch
            %336 = sbr.rel (0) target = $region197
          $region196: #{tpu_custom_call.1} parent=181 // pred_region
            %s338 = ssub.s32 2, 1
            loop: start=0, step=1, limit=1
            $region198: #{tpu_custom_call.1} parent=196 // loop_pre_header
              _
            $region199: #{tpu_custom_call.1} parent=196 // loop_header
              %s340 = sphi 0, %s344
              %p341 = scmp.ge.s32.totalorder %s340, 1
              %s345 = sphi %s316, %s316
              %s346 = sphi %s317, %s317
            $region200: #{tpu_custom_call.1} parent=196 // loop_header_branch
              %343 = sbr.rel (%p341) target = $region204
            $region201: #{tpu_custom_call.1} parent=196 // loop_body
              %v347 = vld [vmem:[%s345] sm:%s338]
              %348 = vst [vmem:[%s346] sm:%s338] %v347
            $region202: #{tpu_custom_call.1} parent=196 // loop_footer
              %s344 = sadd.s32 1, %s340
            $region203: #{tpu_custom_call.1} parent=196 // loop_footer_branch
              %339 = sbr.rel target = $region199
            $region204: #{tpu_custom_call.1} parent=196 // loop_exit
              _
          $region197: #{tpu_custom_call.1} parent=181 // pred_fallthru
            _
        $region182: #{tpu_custom_call.1} parent=23 // pred_fallthru
          _
        // Predicated region
        $region183: #{tpu_custom_call.1} parent=23 // pred_check
          _
        $region184: #{tpu_custom_call.1} parent=23 // pred_check_branch
          %322 = sbr.rel (0) target = $region186
        $region185: #{tpu_custom_call.1} parent=23 // pred_region
          %s324 = ssub.s32 2, 1
          loop: start=0, step=1, limit=1
          $region187: #{tpu_custom_call.1} parent=185 // loop_pre_header
            _
          $region188: #{tpu_custom_call.1} parent=185 // loop_header
            %s326 = sphi 0, %s330
            %p327 = scmp.ge.s32.totalorder %s326, 1
            %s331 = sphi %s316, %s316
            %s332 = sphi %s317, %s317
          $region189: #{tpu_custom_call.1} parent=185 // loop_header_branch
            %329 = sbr.rel (%p327) target = $region193
          $region190: #{tpu_custom_call.1} parent=185 // loop_body
            %v333 = vld [vmem:[%s331] sm:%s324]
            %334 = vst [vmem:[%s332] sm:%s324] %v333
          $region191: #{tpu_custom_call.1} parent=185 // loop_footer
            %s330 = sadd.s32 1, %s326
          $region192: #{tpu_custom_call.1} parent=185 // loop_footer_branch
            %325 = sbr.rel target = $region188
          $region193: #{tpu_custom_call.1} parent=185 // loop_exit
            _
        $region186: #{tpu_custom_call.1} parent=23 // pred_fallthru
          _
        // Predicated region
        $region205: #{tpu_custom_call.1} parent=23 // pred_check
          _
        $region206: #{tpu_custom_call.1} parent=23 // pred_check_branch
          %351 = sbr.rel (0) target = $region208
        $region207: #{tpu_custom_call.1} parent=23 // pred_region
          %352 = vsyncadd %s318, 16
        $region208: #{tpu_custom_call.1} parent=23 // pred_fallthru
          _
        %s353 = sadd.s32 %s121, 6
        %s354 = sld [smem:[#allocation4 + %s353]]
        %s355 = scalar_lea.vmem [#allocation5], %s354
        %s356 = scalar_lea.vmem %s120, 6 [#allocation8]
        %s357 = scalar_lea.sflag [#allocation2], 6
        // Predicated region
        $region209: #{tpu_custom_call.1} parent=23 // pred_check
          _
        $region210: #{tpu_custom_call.1} parent=23 // pred_check_branch
          %359 = sbr.rel target = $region212
        $region211: #{tpu_custom_call.1} parent=23 // pred_region
          // Predicated region
          $region224: #{tpu_custom_call.1} parent=211 // pred_check
            _
          $region225: #{tpu_custom_call.1} parent=211 // pred_check_branch
            %375 = sbr.rel (0) target = $region227
          $region226: #{tpu_custom_call.1} parent=211 // pred_region
            %s377 = ssub.s32 2, 1
            loop: start=0, step=1, limit=1
            $region228: #{tpu_custom_call.1} parent=226 // loop_pre_header
              _
            $region229: #{tpu_custom_call.1} parent=226 // loop_header
              %s379 = sphi 0, %s383
              %p380 = scmp.ge.s32.totalorder %s379, 1
              %s384 = sphi %s355, %s355
              %s385 = sphi %s356, %s356
            $region230: #{tpu_custom_call.1} parent=226 // loop_header_branch
              %382 = sbr.rel (%p380) target = $region234
            $region231: #{tpu_custom_call.1} parent=226 // loop_body
              %v386 = vld [vmem:[%s384] sm:%s377]
              %387 = vst [vmem:[%s385] sm:%s377] %v386
            $region232: #{tpu_custom_call.1} parent=226 // loop_footer
              %s383 = sadd.s32 1, %s379
            $region233: #{tpu_custom_call.1} parent=226 // loop_footer_branch
              %378 = sbr.rel target = $region229
            $region234: #{tpu_custom_call.1} parent=226 // loop_exit
              _
          $region227: #{tpu_custom_call.1} parent=211 // pred_fallthru
            _
        $region212: #{tpu_custom_call.1} parent=23 // pred_fallthru
          _
        // Predicated region
        $region213: #{tpu_custom_call.1} parent=23 // pred_check
          _
        $region214: #{tpu_custom_call.1} parent=23 // pred_check_branch
          %361 = sbr.rel (0) target = $region216
        $region215: #{tpu_custom_call.1} parent=23 // pred_region
          %s363 = ssub.s32 2, 1
          loop: start=0, step=1, limit=1
          $region217: #{tpu_custom_call.1} parent=215 // loop_pre_header
            _
          $region218: #{tpu_custom_call.1} parent=215 // loop_header
            %s365 = sphi 0, %s369
            %p366 = scmp.ge.s32.totalorder %s365, 1
            %s370 = sphi %s355, %s355
            %s371 = sphi %s356, %s356
          $region219: #{tpu_custom_call.1} parent=215 // loop_header_branch
            %368 = sbr.rel (%p366) target = $region223
          $region220: #{tpu_custom_call.1} parent=215 // loop_body
            %v372 = vld [vmem:[%s370] sm:%s363]
            %373 = vst [vmem:[%s371] sm:%s363] %v372
          $region221: #{tpu_custom_call.1} parent=215 // loop_footer
            %s369 = sadd.s32 1, %s365
          $region222: #{tpu_custom_call.1} parent=215 // loop_footer_branch
            %364 = sbr.rel target = $region218
          $region223: #{tpu_custom_call.1} parent=215 // loop_exit
            _
        $region216: #{tpu_custom_call.1} parent=23 // pred_fallthru
          _
        // Predicated region
        $region235: #{tpu_custom_call.1} parent=23 // pred_check
          _
        $region236: #{tpu_custom_call.1} parent=23 // pred_check_branch
          %390 = sbr.rel (0) target = $region238
        $region237: #{tpu_custom_call.1} parent=23 // pred_region
          %391 = vsyncadd %s357, 16
        $region238: #{tpu_custom_call.1} parent=23 // pred_fallthru
          _
        %s392 = sadd.s32 %s121, 7
        %s393 = sld [smem:[#allocation4 + %s392]]
        %s394 = scalar_lea.vmem [#allocation5], %s393
        %s395 = scalar_lea.vmem %s120, 7 [#allocation8]
        %s396 = scalar_lea.sflag [#allocation2], 7
        // Predicated region
        $region239: #{tpu_custom_call.1} parent=23 // pred_check
          _
        $region240: #{tpu_custom_call.1} parent=23 // pred_check_branch
          %398 = sbr.rel target = $region242
        $region241: #{tpu_custom_call.1} parent=23 // pred_region
          // Predicated region
          $region254: #{tpu_custom_call.1} parent=241 // pred_check
            _
          $region255: #{tpu_custom_call.1} parent=241 // pred_check_branch
            %414 = sbr.rel (0) target = $region257
          $region256: #{tpu_custom_call.1} parent=241 // pred_region
            %s416 = ssub.s32 2, 1
            loop: start=0, step=1, limit=1
            $region258: #{tpu_custom_call.1} parent=256 // loop_pre_header
              _
            $region259: #{tpu_custom_call.1} parent=256 // loop_header
              %s418 = sphi 0, %s422
              %p419 = scmp.ge.s32.totalorder %s418, 1
              %s423 = sphi %s394, %s394
              %s424 = sphi %s395, %s395
            $region260: #{tpu_custom_call.1} parent=256 // loop_header_branch
              %421 = sbr.rel (%p419) target = $region264
            $region261: #{tpu_custom_call.1} parent=256 // loop_body
              %v425 = vld [vmem:[%s423] sm:%s416]
              %426 = vst [vmem:[%s424] sm:%s416] %v425
            $region262: #{tpu_custom_call.1} parent=256 // loop_footer
              %s422 = sadd.s32 1, %s418
            $region263: #{tpu_custom_call.1} parent=256 // loop_footer_branch
              %417 = sbr.rel target = $region259
            $region264: #{tpu_custom_call.1} parent=256 // loop_exit
              _
          $region257: #{tpu_custom_call.1} parent=241 // pred_fallthru
            _
        $region242: #{tpu_custom_call.1} parent=23 // pred_fallthru
          _
        // Predicated region
        $region243: #{tpu_custom_call.1} parent=23 // pred_check
          _
        $region244: #{tpu_custom_call.1} parent=23 // pred_check_branch
          %400 = sbr.rel (0) target = $region246
        $region245: #{tpu_custom_call.1} parent=23 // pred_region
          %s402 = ssub.s32 2, 1
          loop: start=0, step=1, limit=1
          $region247: #{tpu_custom_call.1} parent=245 // loop_pre_header
            _
          $region248: #{tpu_custom_call.1} parent=245 // loop_header
            %s404 = sphi 0, %s408
            %p405 = scmp.ge.s32.totalorder %s404, 1
            %s409 = sphi %s394, %s394
            %s410 = sphi %s395, %s395
          $region249: #{tpu_custom_call.1} parent=245 // loop_header_branch
            %407 = sbr.rel (%p405) target = $region253
          $region250: #{tpu_custom_call.1} parent=245 // loop_body
            %v411 = vld [vmem:[%s409] sm:%s402]
            %412 = vst [vmem:[%s410] sm:%s402] %v411
          $region251: #{tpu_custom_call.1} parent=245 // loop_footer
            %s408 = sadd.s32 1, %s404
          $region252: #{tpu_custom_call.1} parent=245 // loop_footer_branch
            %403 = sbr.rel target = $region248
          $region253: #{tpu_custom_call.1} parent=245 // loop_exit
            _
        $region246: #{tpu_custom_call.1} parent=23 // pred_fallthru
          _
        // Predicated region
        $region265: #{tpu_custom_call.1} parent=23 // pred_check
          _
        $region266: #{tpu_custom_call.1} parent=23 // pred_check_branch
          %429 = sbr.rel (0) target = $region268
        $region267: #{tpu_custom_call.1} parent=23 // pred_region
          %430 = vsyncadd %s396, 16
        $region268: #{tpu_custom_call.1} parent=23 // pred_fallthru
          _
        %s431 = smul.u32 1, 1
        %s432 = sshll.u32 %s431, 4
        %433 = dma.done [#allocation2], %s432
        %s434 = sshll.u32 %s431, 4
        %435 = dma.done %s162, %s434
        %s436 = sshll.u32 %s431, 4
        %437 = dma.done %s201, %s436
        %s438 = sshll.u32 %s431, 4
        %439 = dma.done %s240, %s438
        %s440 = sshll.u32 %s431, 4
        %441 = dma.done %s279, %s440
        %s442 = sshll.u32 %s431, 4
        %443 = dma.done %s318, %s442
        %s444 = sshll.u32 %s431, 4
        %445 = dma.done %s357, %s444
        %s446 = sshll.u32 %s431, 4
        %447 = dma.done %s396, %s446
        %s448 = sand.u32 %s54, 1
        %s449 = scalar_lea.sflag [#allocation7], %s448
        %s450 = sand.u32 %s54, 1
        %s451 = smul.addr %s450, 8
        %s452 = scalar_lea.vmem [#allocation8], %s451
        // Predicated region
        $region269: #{tpu_custom_call.1} parent=23 // pred_check
          %p453 = pneg %p64
        $region270: #{tpu_custom_call.1} parent=23 // pred_check_branch
          %455 = sbr.rel (%p453) target = $region272
        $region271: #{tpu_custom_call.1} parent=23 // pred_region
          %457 = vsyncadd %s449, 0
          %s458 = smul.addr %s25, 8
          %s459 = scalar_lea.hbm %s2, %s458
          %s461 = sshll.u32 %s452, 4
          %s462 = int_to_ptr.vmem [resolvable:$true] %s461
          %s463 = sshll.u32 %s459, 4
          %s464 = int_to_ptr.hbm [resolvable:$true] %s463
          %466 = dma.vmem_to_hbm [thread:$0]  %s462, 128, %s464, %s449
        $region272: #{tpu_custom_call.1} parent=23 // pred_fallthru
          _
      $region24: #{tpu_custom_call.1} parent=5 // pred_fallthru
        _
      %p467 = scmp.le.s32.totalorder 2, %s20
      // Predicated region
      $region273: #{tpu_custom_call.1} parent=5 // pred_check
        %p468 = pneg %p467
      $region274: #{tpu_custom_call.1} parent=5 // pred_check_branch
        %470 = sbr.rel (%p468) target = $region276
      $region275: #{tpu_custom_call.1} parent=5 // pred_region
        %s471 = ssub.s32 %s20, 2
        // Predicated region
        $region277: #{tpu_custom_call.1} parent=275 // pred_check
          %p472 = pneg %p70
        $region278: #{tpu_custom_call.1} parent=275 // pred_check_branch
          %474 = sbr.rel (%p472) target = $region280
        $region279: #{tpu_custom_call.1} parent=275 // pred_region
          %s475 = sand.u32 %s55, 1
          %s476 = scalar_lea.sflag [#allocation7], %s475
          %s477 = sand.u32 %s55, 1
          %s478 = smul.addr %s477, 8
          %s479 = scalar_lea.vmem [#allocation8], %s478
          %481 = dma.done %s476, 128
        $region280: #{tpu_custom_call.1} parent=275 // pred_fallthru
          _
      $region276: #{tpu_custom_call.1} parent=5 // pred_fallthru
        _
    $region6: #{tpu_custom_call.1} parent=1 // loop_footer
      %s24 = sadd.s32 1, %s20
    $region7: #{tpu_custom_call.1} parent=1 // loop_footer_branch
      %19 = sbr.rel target = $region3
    $region8: #{tpu_custom_call.1} parent=1 // loop_exit
      _
    %482 = vsyncpa [#allocation6], 1
    %s483 = scalar_lea.sflag [#allocation6], 1
    %484 = vsyncpa %s483, 1
    %485 = vsyncpa [#allocation7], 1
    %s486 = scalar_lea.sflag [#allocation7], 1
    %487 = vsyncpa %s486, 1
  %488 = vsyncmov [#allocation2]
  %s489 = vpop.sfrf %488
  %p490 = scmp.eq.s32.totalorder %s489, 0
  %p491 = pneg %p490
  %493 = shalt.err (%p491)
  %s494 = scalar_lea.sflag [#allocation2], 1
  %495 = vsyncmov %s494
  %s496 = vpop.sfrf %495
  %p497 = scmp.eq.s32.totalorder %s496, 0
  %p498 = pneg %p497
  %500 = shalt.err (%p498)
  %s501 = scalar_lea.sflag [#allocation2], 2
  %502 = vsyncmov %s501
  %s503 = vpop.sfrf %502
  %p504 = scmp.eq.s32.totalorder %s503, 0
  %p505 = pneg %p504
  %507 = shalt.err (%p505)
  %s508 = scalar_lea.sflag [#allocation2], 3
  %509 = vsyncmov %s508
  %s510 = vpop.sfrf %509
  %p511 = scmp.eq.s32.totalorder %s510, 0
  %p512 = pneg %p511
  %514 = shalt.err (%p512)
  %s515 = scalar_lea.sflag [#allocation2], 4
  %516 = vsyncmov %s515
  %s517 = vpop.sfrf %516
  %p518 = scmp.eq.s32.totalorder %s517, 0
  %p519 = pneg %p518
  %521 = shalt.err (%p519)
  %s522 = scalar_lea.sflag [#allocation2], 5
  %523 = vsyncmov %s522
  %s524 = vpop.sfrf %523
  %p525 = scmp.eq.s32.totalorder %s524, 0
  %p526 = pneg %p525
  %528 = shalt.err (%p526)
  %s529 = scalar_lea.sflag [#allocation2], 6
  %530 = vsyncmov %s529
  %s531 = vpop.sfrf %530
  %p532 = scmp.eq.s32.totalorder %s531, 0
  %p533 = pneg %p532
  %535 = shalt.err (%p533)
  %s536 = scalar_lea.sflag [#allocation2], 7
  %537 = vsyncmov %s536
  %s538 = vpop.sfrf %537
  %p539 = scmp.eq.s32.totalorder %s538, 0
  %p540 = pneg %p539
  %542 = shalt.err (%p540)

</llo_original>
